<compile_context>
chip_gen: v6e
topology: v6e:2x2x1
jax: 0.10.0
libtpu: 0.0.40
codegen_flags: <defaults>
</compile_context>

<pallas_src>
import jax
import jax.numpy as jnp
from jax.experimental import pallas as pl
from jax.experimental.pallas import tpu as pltpu

IN_DIM = 28 * 28   # 784
K_PAD = 896        # 7 * 128  (lane-aligned K for the first matmul)
HID = 512
OUT = 10
OUT_PAD = 128      # lane-dense output width


def mlp_kernel(x_ref, w1_ref, b1_ref, w2_ref, b2_ref, w3_ref, b3_ref, o_ref):
    # Layer 1: Linear(896(pad of 784), 512) + ReLU   -- bf16 MXU, fp32 acc
    h1 = jnp.dot(x_ref[...], w1_ref[...], preferred_element_type=jnp.float32)
    h1 = jnp.maximum(h1 + b1_ref[...], 0.0).astype(jnp.bfloat16)
    # Layer 2: Linear(512, 512) + ReLU
    h2 = jnp.dot(h1, w2_ref[...], preferred_element_type=jnp.float32)
    h2 = jnp.maximum(h2 + b2_ref[...], 0.0).astype(jnp.bfloat16)
    # Layer 3: Linear(512, 128(pad of 10))  -- logits, no activation
    logits = jnp.dot(h2, w3_ref[...], preferred_element_type=jnp.float32)
    o_ref[...] = (logits + b3_ref[...]).astype(o_ref.dtype)


def neural_network_forward(x_nchw, params, *, tb=512):
    """x_nchw: (B, 1, 28, 28) float32  ->  logits (B, 10) float32."""
    w1, b1, w2, b2, w3, b3 = params   # (in, out) layout, fp32
    B = x_nchw.shape[0]

    # nn.Flatten(): (B, 784) -> cast to bf16 first, then pad K to 896.
    x = x_nchw.reshape(B, -1).astype(jnp.bfloat16)
    x = jnp.pad(x, ((0, 0), (0, K_PAD - IN_DIM)))

    # Weights: bf16 for the MXU (zero-pad W1 rows / W3,b3 cols). Biases stay fp32.
    w1p = jnp.pad(w1, ((0, K_PAD - IN_DIM), (0, 0))).astype(jnp.bfloat16)
    w2b = w2.astype(jnp.bfloat16)
    w3p = jnp.pad(w3, ((0, 0), (0, OUT_PAD - OUT))).astype(jnp.bfloat16)
    b3p = jnp.pad(b3, ((0, 0), (0, OUT_PAD - OUT)))

    # Batch tile: multiple of 8, capped at `tb`; pad B up to a whole number of tiles.
    tb = max(8, min(tb, ((B + 7) // 8) * 8))
    b_pad = ((B + tb - 1) // tb) * tb
    if b_pad != B:
        x = jnp.pad(x, ((0, b_pad - B), (0, 0)))

    grid = (b_pad // tb,)
    out = pl.pallas_call(
        mlp_kernel,
        out_shape=jax.ShapeDtypeStruct((b_pad, OUT_PAD), jnp.float32),
        grid=grid,
        in_specs=[
            pl.BlockSpec((tb, K_PAD), lambda i: (i, 0)),       # x tile (pipelined)
            pl.BlockSpec((K_PAD, HID), lambda i: (0, 0)),      # W1 (VMEM-resident)
            pl.BlockSpec((1, HID), lambda i: (0, 0)),          # b1 (fp32)
            pl.BlockSpec((HID, HID), lambda i: (0, 0)),        # W2
            pl.BlockSpec((1, HID), lambda i: (0, 0)),          # b2 (fp32)
            pl.BlockSpec((HID, OUT_PAD), lambda i: (0, 0)),    # W3 (padded)
            pl.BlockSpec((1, OUT_PAD), lambda i: (0, 0)),      # b3 (padded, fp32)
        ],
        out_specs=pl.BlockSpec((tb, OUT_PAD), lambda i: (i, 0)),
        compiler_params=pltpu.CompilerParams(
            dimension_semantics=("parallel",),   # shards batch grid across TCs (v7x)
            vmem_limit_bytes=64 << 20,
        ),
    )(x, w1p, b1, w2b, b2, w3p, b3p)

    return out[:B, :OUT]


def init_params(key):
    """Deterministic init matching the torch layer shapes (weights transposed)."""
    ks = jax.random.split(key, 6)

    def linear(kw, kb, fan_in, fan_out):
        bound = 1.0 / jnp.sqrt(fan_in)
        w = jax.random.uniform(kw, (fan_in, fan_out), jnp.float32, -bound, bound)
        b = jax.random.uniform(kb, (1, fan_out), jnp.float32, -bound, bound)
        return w, b

    w1, b1 = linear(ks[0], ks[1], IN_DIM, HID)
    w2, b2 = linear(ks[2], ks[3], HID, HID)
    w3, b3 = linear(ks[4], ks[5], HID, OUT)
    return (w1, b1, w2, b2, w3, b3)


if __name__ == "__main__":
    key = jax.random.PRNGKey(0)
    k_params, k_x = jax.random.split(key)

    params = init_params(k_params)
    x = jax.random.normal(k_x, (8, 1, 28, 28), dtype=jnp.float32)  # small batch

    logits = neural_network_forward(x, params)
    jax.block_until_ready(logits)
    assert logits.shape == (8, OUT)

    # Sanity check against a plain-JAX reference using the same bf16 casting
    # (fp32 accumulation), so tolerances stay tight.
    w1, b1, w2, b2, w3, b3 = params
    xf = x.reshape(x.shape[0], -1).astype(jnp.bfloat16)
    h = jnp.dot(xf, w1.astype(jnp.bfloat16), preferred_element_type=jnp.float32) + b1
    h = jnp.maximum(h, 0.0).astype(jnp.bfloat16)
    h = jnp.dot(h, w2.astype(jnp.bfloat16), preferred_element_type=jnp.float32) + b2
    h = jnp.maximum(h, 0.0).astype(jnp.bfloat16)
    ref = jnp.dot(h, w3.astype(jnp.bfloat16), preferred_element_type=jnp.float32) + b3

    assert jnp.allclose(logits, ref, atol=2e-2, rtol=2e-2), (
        float(jnp.max(jnp.abs(logits - ref)))
    )

    print("KERNEL_OK")
</pallas_src>

<mosaic_0001>
module attributes {stable_mosaic.version = 11 : i64} {
  func.func @mlp_kernel(%arg0: i32, %arg1: memref<8x896xbf16, #tpu.memory_space<vmem>>, %arg2: memref<896x512xbf16, #tpu.memory_space<vmem>>, %arg3: memref<1x512xf32, #tpu.memory_space<vmem>>, %arg4: memref<512x512xbf16, #tpu.memory_space<vmem>>, %arg5: memref<1x512xf32, #tpu.memory_space<vmem>>, %arg6: memref<512x128xbf16, #tpu.memory_space<vmem>>, %arg7: memref<1x128xf32, #tpu.memory_space<vmem>>, %arg8: memref<8x128xf32, #tpu.memory_space<vmem>>) attributes {dimension_semantics = [#tpu.dimension_semantics<parallel>], iteration_bounds = array<i64: 1>, scalar_prefetch = 0 : i64, scratch_operands = 0 : i64, tpu.core_type = #tpu.core_type<tc>, window_params = [{transform_indices = @transform_0, window_bounds = array<i64: 8, 896>}, {pipeline_mode = #tpu.pipeline_mode<synchronous>, transform_indices = @transform_1, window_bounds = array<i64: 896, 512>}, {pipeline_mode = #tpu.pipeline_mode<synchronous>, transform_indices = @transform_2, window_bounds = array<i64: 1, 512>}, {pipeline_mode = #tpu.pipeline_mode<synchronous>, transform_indices = @transform_3, window_bounds = array<i64: 512, 512>}, {pipeline_mode = #tpu.pipeline_mode<synchronous>, transform_indices = @transform_4, window_bounds = array<i64: 1, 512>}, {pipeline_mode = #tpu.pipeline_mode<synchronous>, transform_indices = @transform_5, window_bounds = array<i64: 512, 128>}, {pipeline_mode = #tpu.pipeline_mode<synchronous>, transform_indices = @transform_6, window_bounds = array<i64: 1, 128>}, {transform_indices = @transform_7, window_bounds = array<i64: 8, 128>}]} {
    %c0 = arith.constant 0 : index
    %c0_0 = arith.constant 0 : index
    %0 = vector.load %arg1[%c0, %c0_0] : memref<8x896xbf16, #tpu.memory_space<vmem>>, vector<8x896xbf16>
    %c0_1 = arith.constant 0 : index
    %c0_2 = arith.constant 0 : index
    %1 = vector.load %arg2[%c0_1, %c0_2] : memref<896x512xbf16, #tpu.memory_space<vmem>>, vector<896x512xbf16>
    %cst = arith.constant dense<0.000000e+00> : vector<8x512xf32>
    %2 = tpu.matmul %0, %1, %cst {dimension_numbers = #tpu.dot_dimension_numbers<[1], [0], [0], [1], [0, 0, 1, 1], [], []>} : vector<8x896xbf16>, vector<896x512xbf16>, vector<8x512xf32> -> vector<8x512xf32>
    %c0_3 = arith.constant 0 : index
    %c0_4 = arith.constant 0 : index
    %3 = vector.load %arg3[%c0_3, %c0_4] : memref<1x512xf32, #tpu.memory_space<vmem>>, vector<1x512xf32>
    %4 = vector.broadcast %3 : vector<1x512xf32> to vector<8x512xf32>
    %5 = arith.addf %2, %4 : vector<8x512xf32>
    %cst_5 = arith.constant 0.000000e+00 : f32
    %6 = vector.broadcast %cst_5 : f32 to vector<8x512xf32>
    %7 = arith.maximumf %5, %6 : vector<8x512xf32>
    %8 = arith.truncf %7 : vector<8x512xf32> to vector<8x512xbf16>
    %c0_6 = arith.constant 0 : index
    %c0_7 = arith.constant 0 : index
    %9 = vector.load %arg4[%c0_6, %c0_7] : memref<512x512xbf16, #tpu.memory_space<vmem>>, vector<512x512xbf16>
    %cst_8 = arith.constant dense<0.000000e+00> : vector<8x512xf32>
    %10 = tpu.matmul %8, %9, %cst_8 {dimension_numbers = #tpu.dot_dimension_numbers<[1], [0], [0], [1], [0, 0, 1, 1], [], []>} : vector<8x512xbf16>, vector<512x512xbf16>, vector<8x512xf32> -> vector<8x512xf32>
    %c0_9 = arith.constant 0 : index
    %c0_10 = arith.constant 0 : index
    %11 = vector.load %arg5[%c0_9, %c0_10] : memref<1x512xf32, #tpu.memory_space<vmem>>, vector<1x512xf32>
    %12 = vector.broadcast %11 : vector<1x512xf32> to vector<8x512xf32>
    %13 = arith.addf %10, %12 : vector<8x512xf32>
    %cst_11 = arith.constant 0.000000e+00 : f32
    %14 = vector.broadcast %cst_11 : f32 to vector<8x512xf32>
    %15 = arith.maximumf %13, %14 : vector<8x512xf32>
    %16 = arith.truncf %15 : vector<8x512xf32> to vector<8x512xbf16>
    %c0_12 = arith.constant 0 : index
    %c0_13 = arith.constant 0 : index
    %17 = vector.load %arg6[%c0_12, %c0_13] : memref<512x128xbf16, #tpu.memory_space<vmem>>, vector<512x128xbf16>
    %cst_14 = arith.constant dense<0.000000e+00> : vector<8x128xf32>
    %18 = tpu.matmul %16, %17, %cst_14 {dimension_numbers = #tpu.dot_dimension_numbers<[1], [0], [0], [1], [0, 0, 1, 1], [], []>} : vector<8x512xbf16>, vector<512x128xbf16>, vector<8x128xf32> -> vector<8x128xf32>
    %c0_15 = arith.constant 0 : index
    %c0_16 = arith.constant 0 : index
    %19 = vector.load %arg7[%c0_15, %c0_16] : memref<1x128xf32, #tpu.memory_space<vmem>>, vector<1x128xf32>
    %20 = vector.broadcast %19 : vector<1x128xf32> to vector<8x128xf32>
    %21 = arith.addf %18, %20 : vector<8x128xf32>
    %c0_17 = arith.constant 0 : index
    %c0_18 = arith.constant 0 : index
    %22 = vector.load %arg8[%c0_17, %c0_18] : memref<8x128xf32, #tpu.memory_space<vmem>>, vector<8x128xf32>
    tpu.vector_store %arg8[%c0_17, %c0_18], %21 {strides = array<i32>} : memref<8x128xf32, #tpu.memory_space<vmem>>, vector<8x128xf32>,
    return
  }
  func.func @transform_0(%arg0: i32) -> (i32, i32) {
    %c0_i32 = arith.constant 0 : i32
    %c0_i32_0 = arith.constant 0 : i32
    return %arg0, %c0_i32 : i32, i32
  }
  func.func @transform_1(%arg0: i32) -> (i32, i32) {
    %c0_i32 = arith.constant 0 : i32
    %c0_i32_0 = arith.constant 0 : i32
    %c0_i32_1 = arith.constant 0 : i32
    return %c0_i32, %c0_i32_0 : i32, i32
  }
  func.func @transform_2(%arg0: i32) -> (i32, i32) {
    %c0_i32 = arith.constant 0 : i32
    %c0_i32_0 = arith.constant 0 : i32
    %c0_i32_1 = arith.constant 0 : i32
    return %c0_i32, %c0_i32_0 : i32, i32
  }
  func.func @transform_3(%arg0: i32) -> (i32, i32) {
    %c0_i32 = arith.constant 0 : i32
    %c0_i32_0 = arith.constant 0 : i32
    %c0_i32_1 = arith.constant 0 : i32
    return %c0_i32, %c0_i32_0 : i32, i32
  }
  func.func @transform_4(%arg0: i32) -> (i32, i32) {
    %c0_i32 = arith.constant 0 : i32
    %c0_i32_0 = arith.constant 0 : i32
    %c0_i32_1 = arith.constant 0 : i32
    return %c0_i32, %c0_i32_0 : i32, i32
  }
  func.func @transform_5(%arg0: i32) -> (i32, i32) {
    %c0_i32 = arith.constant 0 : i32
    %c0_i32_0 = arith.constant 0 : i32
    %c0_i32_1 = arith.constant 0 : i32
    return %c0_i32, %c0_i32_0 : i32, i32
  }
  func.func @transform_6(%arg0: i32) -> (i32, i32) {
    %c0_i32 = arith.constant 0 : i32
    %c0_i32_0 = arith.constant 0 : i32
    %c0_i32_1 = arith.constant 0 : i32
    return %c0_i32, %c0_i32_0 : i32, i32
  }
  func.func @transform_7(%arg0: i32) -> (i32, i32) {
    %c0_i32 = arith.constant 0 : i32
    %c0_i32_0 = arith.constant 0 : i32
    return %arg0, %c0_i32 : i32, i32
  }
}

</mosaic_0001>

<llo_original>
// kernel: tpu_custom_call.1
$region0: #{tpu_custom_call.1}
  #allocation0 [shape = 'u32[]', space=smem, size = 0x4, offset = 0x4, fixed_abs, tag = 'smem constant byte address 0x4 - core index']
  #allocation1 [shape = 'u32[144,128]{1,0:T(1,128)}', space=vmem, size = 0x12000, scoped, tag = 'internal scratch']
  %s0 = inlined_call_operand.hbm [shape: bf16[8,896], index: 0, kind: input, shape index: {}]
  %s1 = inlined_call_operand.hbm [shape: bf16[896,512], index: 1, kind: input, shape index: {}]
  %s2 = inlined_call_operand.hbm [shape: f32[1,512], index: 2, kind: input, shape index: {}]
  %s3 = inlined_call_operand.hbm [shape: bf16[512,512], index: 3, kind: input, shape index: {}]
  %s4 = inlined_call_operand.vmem [shape: f32[1,512], index: 4, kind: input, shape index: {}]
  %s5 = inlined_call_operand.hbm [shape: bf16[512,128], index: 5, kind: input, shape index: {}]
  %s6 = inlined_call_operand.vmem [shape: f32[1,128], index: 6, kind: input, shape index: {}]
  %s7 = inlined_call_operand.hbm [shape: f32[8,128], index: 7, kind: output, shape index: {}]
  %s8 = sld [smem:[#allocation0]]
  $region58: #{tpu_custom_call.1} parent=0
    _
  %s10 = ssub.s32 1, %s8
  %s11 = scalar_select 0, %s10, %s8
  $region1: #{tpu_custom_call.1} parent=0
    #allocation2 [shape = 'u8[14336]{0}', space=vmem, size = 0x3800, scoped, tag = 'input window, operand 0, single buffered']
    #allocation3 [shape = 's32[1]{0}', space=sflag, size = 0x4, scoped, tag = 'scoped memory for tpu_custom_call.1']
    #allocation4 [shape = 's32[1]{0}', space=sflag, size = 0x4, scoped, tag = 'scoped memory for tpu_custom_call.1']
    #allocation5 [shape = 'u8[917504]{0}', space=vmem, size = 0xe0000, scoped, tag = 'input window, operand 1, single buffered']
    #allocation6 [shape = 's32[1]{0}', space=sflag, size = 0x4, scoped, tag = 'scoped memory for tpu_custom_call.1']
    #allocation7 [shape = 'u8[2048]{0}', space=vmem, size = 0x800, scoped, tag = 'input window, operand 2, single buffered']
    #allocation8 [shape = 'u8[524288]{0}', space=vmem, size = 0x80000, scoped, tag = 'input window, operand 3, single buffered']
    #allocation9 [shape = 's32[1]{0}', space=sflag, size = 0x4, scoped, tag = 'scoped memory for tpu_custom_call.1']
    #allocation10 [shape = 'u8[131072]{0}', space=vmem, size = 0x20000, scoped, tag = 'input window, operand 5, single buffered']
    #allocation11 [shape = 'u8[4096]{0}', space=vmem, size = 0x1000, scoped, tag = 'output window, operand 0, single buffered']
    %12 = vsyncpa [#allocation3], 0
    %13 = vsyncpa [#allocation6], 0
    %14 = vsyncpa [#allocation9], 0
    %15 = vsyncpa [#allocation4], 0
    // Predicated region
    $region2: #{tpu_custom_call.1} parent=1 // pred_check
      _
    $region3: #{tpu_custom_call.1} parent=1 // pred_check_branch
      %17 = sbr.rel (0) target = $region5
    $region4: #{tpu_custom_call.1} parent=1 // pred_region
      %s19 = ssub.s32 448, 448
      %20 = vsyncadd [#allocation3], %s19
      %s22 = sshll.u32 [#allocation2], 4
      %s23 = int_to_ptr.vmem [resolvable:$true] %s22
      %25 = dma.hbm_to_vmem [thread:$0]  %s0, 448, %s23, [#allocation3]
    $region5: #{tpu_custom_call.1} parent=1 // pred_fallthru
      _
    // Predicated region
    $region6: #{tpu_custom_call.1} parent=1 // pred_check
      _
    $region7: #{tpu_custom_call.1} parent=1 // pred_check_branch
      %27 = sbr.rel (0) target = $region9
    $region8: #{tpu_custom_call.1} parent=1 // pred_region
      %s29 = ssub.s32 28672, 28672
      %30 = vsyncadd [#allocation6], %s29
      %s31 = sshll.u32 [#allocation5], 4
      %s32 = int_to_ptr.vmem [resolvable:$true] %s31
      %37 = dma.hbm_to_vmem [thread:$0]  %s1, 28672, %s32, [#allocation6], 256, 256, 16
    $region9: #{tpu_custom_call.1} parent=1 // pred_fallthru
      _
    // Predicated region
    $region10: #{tpu_custom_call.1} parent=1 // pred_check
      _
    $region11: #{tpu_custom_call.1} parent=1 // pred_check_branch
      %39 = sbr.rel (0) target = $region13
    $region12: #{tpu_custom_call.1} parent=1 // pred_region
      %s41 = ssub.s32 64, 64
      %42 = vsyncadd [#allocation6], %s41
      %s44 = sshll.u32 [#allocation7], 4
      %s45 = int_to_ptr.vmem [resolvable:$true] %s44
      %47 = dma.hbm_to_vmem [thread:$0]  %s2, 64, %s45, [#allocation6]
    $region13: #{tpu_custom_call.1} parent=1 // pred_fallthru
      _
    // Predicated region
    $region14: #{tpu_custom_call.1} parent=1 // pred_check
      _
    $region15: #{tpu_custom_call.1} parent=1 // pred_check_branch
      %49 = sbr.rel (0) target = $region17
    $region16: #{tpu_custom_call.1} parent=1 // pred_region
      %s51 = ssub.s32 16384, 16384
      %52 = vsyncadd [#allocation9], %s51
      %s53 = sshll.u32 [#allocation8], 4
      %s54 = int_to_ptr.vmem [resolvable:$true] %s53
      %59 = dma.hbm_to_vmem [thread:$0]  %s3, 16384, %s54, [#allocation9], 256, 256, 16
    $region17: #{tpu_custom_call.1} parent=1 // pred_fallthru
      _
    // Predicated region
    $region18: #{tpu_custom_call.1} parent=1 // pred_check
      _
    $region19: #{tpu_custom_call.1} parent=1 // pred_check_branch
      %61 = sbr.rel (0) target = $region21
    $region20: #{tpu_custom_call.1} parent=1 // pred_region
      _
    $region21: #{tpu_custom_call.1} parent=1 // pred_fallthru
      _
    // Predicated region
    $region22: #{tpu_custom_call.1} parent=1 // pred_check
      _
    $region23: #{tpu_custom_call.1} parent=1 // pred_check_branch
      %63 = sbr.rel (0) target = $region25
    $region24: #{tpu_custom_call.1} parent=1 // pred_region
      %s65 = ssub.s32 4096, 4096
      %66 = vsyncadd [#allocation9], %s65
      %s67 = sshll.u32 [#allocation10], 4
      %s68 = int_to_ptr.vmem [resolvable:$true] %s67
      %73 = dma.hbm_to_vmem [thread:$0]  %s5, 4096, %s68, [#allocation9], 64, 64, 4
    $region25: #{tpu_custom_call.1} parent=1 // pred_fallthru
      _
    // Predicated region
    $region26: #{tpu_custom_call.1} parent=1 // pred_check
      _
    $region27: #{tpu_custom_call.1} parent=1 // pred_check_branch
      %75 = sbr.rel (0) target = $region29
    $region28: #{tpu_custom_call.1} parent=1 // pred_region
      _
    $region29: #{tpu_custom_call.1} parent=1 // pred_fallthru
      _
    // Predicated region
    $region30: #{tpu_custom_call.1} parent=1 // pred_check
      _
    $region31: #{tpu_custom_call.1} parent=1 // pred_check_branch
      %77 = sbr.rel (0) target = $region33
    $region32: #{tpu_custom_call.1} parent=1 // pred_region
      %78 = dma.done [#allocation3], 448
    $region33: #{tpu_custom_call.1} parent=1 // pred_fallthru
      _
    // Predicated region
    $region34: #{tpu_custom_call.1} parent=1 // pred_check
      _
    $region35: #{tpu_custom_call.1} parent=1 // pred_check_branch
      %80 = sbr.rel (0) target = $region37
    $region36: #{tpu_custom_call.1} parent=1 // pred_region
      %81 = dma.done [#allocation6], 28672
    $region37: #{tpu_custom_call.1} parent=1 // pred_fallthru
      _
    // Predicated region
    $region38: #{tpu_custom_call.1} parent=1 // pred_check
      _
    $region39: #{tpu_custom_call.1} parent=1 // pred_check_branch
      %83 = sbr.rel (0) target = $region41
    $region40: #{tpu_custom_call.1} parent=1 // pred_region
      %84 = dma.done [#allocation6], 64
    $region41: #{tpu_custom_call.1} parent=1 // pred_fallthru
      _
    // Predicated region
    $region42: #{tpu_custom_call.1} parent=1 // pred_check
      _
    $region43: #{tpu_custom_call.1} parent=1 // pred_check_branch
      %86 = sbr.rel (0) target = $region45
    $region44: #{tpu_custom_call.1} parent=1 // pred_region
      %87 = dma.done [#allocation9], 16384
    $region45: #{tpu_custom_call.1} parent=1 // pred_fallthru
      _
    // Predicated region
    $region46: #{tpu_custom_call.1} parent=1 // pred_check
      _
    $region47: #{tpu_custom_call.1} parent=1 // pred_check_branch
      %89 = sbr.rel (0) target = $region49
    $region48: #{tpu_custom_call.1} parent=1 // pred_region
      %90 = dma.done [#allocation9], 4096
    $region49: #{tpu_custom_call.1} parent=1 // pred_fallthru
      _
    %v92 = vld [vmem:[#allocation2] sm:$0xff]
    %v93 = vld [vmem:[#allocation2 + $0x8] sm:$0xff]
    %v94 = vld [vmem:[#allocation2 + $0x10] sm:$0xff]
    %v95 = vld [vmem:[#allocation2 + $0x18] sm:$0xf]
    %v96 = vld [vmem:[#allocation5] sm:$0xff]
    %v97 = vld [vmem:[#allocation5 + $0x8] sm:$0xff]
    %v98 = vld [vmem:[#allocation5 + $0x10] sm:$0xff]
    %v99 = vld [vmem:[#allocation5 + $0x18] sm:$0xff]
    %v100 = vld [vmem:[#allocation5 + $0x20] sm:$0xff]
    %v101 = vld [vmem:[#allocation5 + $0x28] sm:$0xff]
    %v102 = vld [vmem:[#allocation5 + $0x30] sm:$0xff]
    %v103 = vld [vmem:[#allocation5 + $0x38] sm:$0xff]
    %v104 = vld [vmem:[#allocation5 + $0x40] sm:$0xff]
    %v105 = vld [vmem:[#allocation5 + $0x48] sm:$0xff]
    %v106 = vld [vmem:[#allocation5 + $0x50] sm:$0xff]
    %v107 = vld [vmem:[#allocation5 + $0x58] sm:$0xff]
    %v108 = vld [vmem:[#allocation5 + $0x60] sm:$0xff]
    %v109 = vld [vmem:[#allocation5 + $0x68] sm:$0xff]
    %v110 = vld [vmem:[#allocation5 + $0x70] sm:$0xff]
    %v111 = vld [vmem:[#allocation5 + $0x78] sm:$0xff]
    %v112 = vld [vmem:[#allocation5 + $0x80] sm:$0xff]
    %v113 = vld [vmem:[#allocation5 + $0x88] sm:$0xff]
    %v114 = vld [vmem:[#allocation5 + $0x90] sm:$0xff]
    %v115 = vld [vmem:[#allocation5 + $0x98] sm:$0xff]
    %v116 = vld [vmem:[#allocation5 + $0xa0] sm:$0xff]
    %v117 = vld [vmem:[#allocation5 + $0xa8] sm:$0xff]
    %v118 = vld [vmem:[#allocation5 + $0xb0] sm:$0xff]
    %v119 = vld [vmem:[#allocation5 + $0xb8] sm:$0xff]
    %v120 = vld [vmem:[#allocation5 + $0xc0] sm:$0xff]
    %v121 = vld [vmem:[#allocation5 + $0xc8] sm:$0xff]
    %v122 = vld [vmem:[#allocation5 + $0xd0] sm:$0xff]
    %v123 = vld [vmem:[#allocation5 + $0xd8] sm:$0xff]
    %v124 = vld [vmem:[#allocation5 + $0xe0] sm:$0xff]
    %v125 = vld [vmem:[#allocation5 + $0xe8] sm:$0xff]
    %v126 = vld [vmem:[#allocation5 + $0xf0] sm:$0xff]
    %v127 = vld [vmem:[#allocation5 + $0xf8] sm:$0xff]
    %v128 = vld [vmem:[#allocation5 + $0x100] sm:$0xff]
    %v129 = vld [vmem:[#allocation5 + $0x108] sm:$0xff]
    %v130 = vld [vmem:[#allocation5 + $0x110] sm:$0xff]
    %v131 = vld [vmem:[#allocation5 + $0x118] sm:$0xff]
    %v132 = vld [vmem:[#allocation5 + $0x120] sm:$0xff]
    %v133 = vld [vmem:[#allocation5 + $0x128] sm:$0xff]
    %v134 = vld [vmem:[#allocation5 + $0x130] sm:$0xff]
    %v135 = vld [vmem:[#allocation5 + $0x138] sm:$0xff]
    %v136 = vld [vmem:[#allocation5 + $0x140] sm:$0xff]
    %v137 = vld [vmem:[#allocation5 + $0x148] sm:$0xff]
    %v138 = vld [vmem:[#allocation5 + $0x150] sm:$0xff]
    %v139 = vld [vmem:[#allocation5 + $0x158] sm:$0xff]
    %v140 = vld [vmem:[#allocation5 + $0x160] sm:$0xff]
    %v141 = vld [vmem:[#allocation5 + $0x168] sm:$0xff]
    %v142 = vld [vmem:[#allocation5 + $0x170] sm:$0xff]
    %v143 = vld [vmem:[#allocation5 + $0x178] sm:$0xff]
    %v144 = vld [vmem:[#allocation5 + $0x180] sm:$0xff]
    %v145 = vld [vmem:[#allocation5 + $0x188] sm:$0xff]
    %v146 = vld [vmem:[#allocation5 + $0x190] sm:$0xff]
    %v147 = vld [vmem:[#allocation5 + $0x198] sm:$0xff]
    %v148 = vld [vmem:[#allocation5 + $0x1a0] sm:$0xff]
    %v149 = vld [vmem:[#allocation5 + $0x1a8] sm:$0xff]
    %v150 = vld [vmem:[#allocation5 + $0x1b0] sm:$0xff]
    %v151 = vld [vmem:[#allocation5 + $0x1b8] sm:$0xff]
    %v152 = vld [vmem:[#allocation5 + $0x1c0] sm:$0xff]
    %v153 = vld [vmem:[#allocation5 + $0x1c8] sm:$0xff]
    %v154 = vld [vmem:[#allocation5 + $0x1d0] sm:$0xff]
    %v155 = vld [vmem:[#allocation5 + $0x1d8] sm:$0xff]
    %v156 = vld [vmem:[#allocation5 + $0x1e0] sm:$0xff]
    %v157 = vld [vmem:[#allocation5 + $0x1e8] sm:$0xff]
    %v158 = vld [vmem:[#allocation5 + $0x1f0] sm:$0xff]
    %v159 = vld [vmem:[#allocation5 + $0x1f8] sm:$0xff]
    %v160 = vld [vmem:[#allocation5 + $0x200] sm:$0xff]
    %v161 = vld [vmem:[#allocation5 + $0x208] sm:$0xff]
    %v162 = vld [vmem:[#allocation5 + $0x210] sm:$0xff]
    %v163 = vld [vmem:[#allocation5 + $0x218] sm:$0xff]
    %v164 = vld [vmem:[#allocation5 + $0x220] sm:$0xff]
    %v165 = vld [vmem:[#allocation5 + $0x228] sm:$0xff]
    %v166 = vld [vmem:[#allocation5 + $0x230] sm:$0xff]
    %v167 = vld [vmem:[#allocation5 + $0x238] sm:$0xff]
    %v168 = vld [vmem:[#allocation5 + $0x240] sm:$0xff]
    %v169 = vld [vmem:[#allocation5 + $0x248] sm:$0xff]
    %v170 = vld [vmem:[#allocation5 + $0x250] sm:$0xff]
    %v171 = vld [vmem:[#allocation5 + $0x258] sm:$0xff]
    %v172 = vld [vmem:[#allocation5 + $0x260] sm:$0xff]
    %v173 = vld [vmem:[#allocation5 + $0x268] sm:$0xff]
    %v174 = vld [vmem:[#allocation5 + $0x270] sm:$0xff]
    %v175 = vld [vmem:[#allocation5 + $0x278] sm:$0xff]
    %v176 = vld [vmem:[#allocation5 + $0x280] sm:$0xff]
    %v177 = vld [vmem:[#allocation5 + $0x288] sm:$0xff]
    %v178 = vld [vmem:[#allocation5 + $0x290] sm:$0xff]
    %v179 = vld [vmem:[#allocation5 + $0x298] sm:$0xff]
    %v180 = vld [vmem:[#allocation5 + $0x2a0] sm:$0xff]
    %v181 = vld [vmem:[#allocation5 + $0x2a8] sm:$0xff]
    %v182 = vld [vmem:[#allocation5 + $0x2b0] sm:$0xff]
    %v183 = vld [vmem:[#allocation5 + $0x2b8] sm:$0xff]
    %v184 = vld [vmem:[#allocation5 + $0x2c0] sm:$0xff]
    %v185 = vld [vmem:[#allocation5 + $0x2c8] sm:$0xff]
    %v186 = vld [vmem:[#allocation5 + $0x2d0] sm:$0xff]
    %v187 = vld [vmem:[#allocation5 + $0x2d8] sm:$0xff]
    %v188 = vld [vmem:[#allocation5 + $0x2e0] sm:$0xff]
    %v189 = vld [vmem:[#allocation5 + $0x2e8] sm:$0xff]
    %v190 = vld [vmem:[#allocation5 + $0x2f0] sm:$0xff]
    %v191 = vld [vmem:[#allocation5 + $0x2f8] sm:$0xff]
    %v192 = vld [vmem:[#allocation5 + $0x300] sm:$0xff]
    %v193 = vld [vmem:[#allocation5 + $0x308] sm:$0xff]
    %v194 = vld [vmem:[#allocation5 + $0x310] sm:$0xff]
    %v195 = vld [vmem:[#allocation5 + $0x318] sm:$0xff]
    %v196 = vld [vmem:[#allocation5 + $0x320] sm:$0xff]
    %v197 = vld [vmem:[#allocation5 + $0x328] sm:$0xff]
    %v198 = vld [vmem:[#allocation5 + $0x330] sm:$0xff]
    %v199 = vld [vmem:[#allocation5 + $0x338] sm:$0xff]
    %v200 = vld [vmem:[#allocation5 + $0x340] sm:$0xff]
    %v201 = vld [vmem:[#allocation5 + $0x348] sm:$0xff]
    %v202 = vld [vmem:[#allocation5 + $0x350] sm:$0xff]
    %v203 = vld [vmem:[#allocation5 + $0x358] sm:$0xff]
    %v204 = vld [vmem:[#allocation5 + $0x360] sm:$0xff]
    %v205 = vld [vmem:[#allocation5 + $0x368] sm:$0xff]
    %v206 = vld [vmem:[#allocation5 + $0x370] sm:$0xff]
    %v207 = vld [vmem:[#allocation5 + $0x378] sm:$0xff]
    %v208 = vld [vmem:[#allocation5 + $0x380] sm:$0xff]
    %v209 = vld [vmem:[#allocation5 + $0x388] sm:$0xff]
    %v210 = vld [vmem:[#allocation5 + $0x390] sm:$0xff]
    %v211 = vld [vmem:[#allocation5 + $0x398] sm:$0xff]
    %v212 = vld [vmem:[#allocation5 + $0x3a0] sm:$0xff]
    %v213 = vld [vmem:[#allocation5 + $0x3a8] sm:$0xff]
    %v214 = vld [vmem:[#allocation5 + $0x3b0] sm:$0xff]
    %v215 = vld [vmem:[#allocation5 + $0x3b8] sm:$0xff]
    %v216 = vld [vmem:[#allocation5 + $0x3c0] sm:$0xff]
    %v217 = vld [vmem:[#allocation5 + $0x3c8] sm:$0xff]
    %v218 = vld [vmem:[#allocation5 + $0x3d0] sm:$0xff]
    %v219 = vld [vmem:[#allocation5 + $0x3d8] sm:$0xff]
    %v220 = vld [vmem:[#allocation5 + $0x3e0] sm:$0xff]
    %v221 = vld [vmem:[#allocation5 + $0x3e8] sm:$0xff]
    %v222 = vld [vmem:[#allocation5 + $0x3f0] sm:$0xff]
    %v223 = vld [vmem:[#allocation5 + $0x3f8] sm:$0xff]
    %v224 = vld [vmem:[#allocation5 + $0x400] sm:$0xff]
    %v225 = vld [vmem:[#allocation5 + $0x408] sm:$0xff]
    %v226 = vld [vmem:[#allocation5 + $0x410] sm:$0xff]
    %v227 = vld [vmem:[#allocation5 + $0x418] sm:$0xff]
    %v228 = vld [vmem:[#allocation5 + $0x420] sm:$0xff]
    %v229 = vld [vmem:[#allocation5 + $0x428] sm:$0xff]
    %v230 = vld [vmem:[#allocation5 + $0x430] sm:$0xff]
    %v231 = vld [vmem:[#allocation5 + $0x438] sm:$0xff]
    %v232 = vld [vmem:[#allocation5 + $0x440] sm:$0xff]
    %v233 = vld [vmem:[#allocation5 + $0x448] sm:$0xff]
    %v234 = vld [vmem:[#allocation5 + $0x450] sm:$0xff]
    %v235 = vld [vmem:[#allocation5 + $0x458] sm:$0xff]
    %v236 = vld [vmem:[#allocation5 + $0x460] sm:$0xff]
    %v237 = vld [vmem:[#allocation5 + $0x468] sm:$0xff]
    %v238 = vld [vmem:[#allocation5 + $0x470] sm:$0xff]
    %v239 = vld [vmem:[#allocation5 + $0x478] sm:$0xff]
    %v240 = vld [vmem:[#allocation5 + $0x480] sm:$0xff]
    %v241 = vld [vmem:[#allocation5 + $0x488] sm:$0xff]
    %v242 = vld [vmem:[#allocation5 + $0x490] sm:$0xff]
    %v243 = vld [vmem:[#allocation5 + $0x498] sm:$0xff]
    %v244 = vld [vmem:[#allocation5 + $0x4a0] sm:$0xff]
    %v245 = vld [vmem:[#allocation5 + $0x4a8] sm:$0xff]
    %v246 = vld [vmem:[#allocation5 + $0x4b0] sm:$0xff]
    %v247 = vld [vmem:[#allocation5 + $0x4b8] sm:$0xff]
    %v248 = vld [vmem:[#allocation5 + $0x4c0] sm:$0xff]
    %v249 = vld [vmem:[#allocation5 + $0x4c8] sm:$0xff]
    %v250 = vld [vmem:[#allocation5 + $0x4d0] sm:$0xff]
    %v251 = vld [vmem:[#allocation5 + $0x4d8] sm:$0xff]
    %v252 = vld [vmem:[#allocation5 + $0x4e0] sm:$0xff]
    %v253 = vld [vmem:[#allocation5 + $0x4e8] sm:$0xff]
    %v254 = vld [vmem:[#allocation5 + $0x4f0] sm:$0xff]
    %v255 = vld [vmem:[#allocation5 + $0x4f8] sm:$0xff]
    %v256 = vld [vmem:[#allocation5 + $0x500] sm:$0xff]
    %v257 = vld [vmem:[#allocation5 + $0x508] sm:$0xff]
    %v258 = vld [vmem:[#allocation5 + $0x510] sm:$0xff]
    %v259 = vld [vmem:[#allocation5 + $0x518] sm:$0xff]
    %v260 = vld [vmem:[#allocation5 + $0x520] sm:$0xff]
    %v261 = vld [vmem:[#allocation5 + $0x528] sm:$0xff]
    %v262 = vld [vmem:[#allocation5 + $0x530] sm:$0xff]
    %v263 = vld [vmem:[#allocation5 + $0x538] sm:$0xff]
    %v264 = vld [vmem:[#allocation5 + $0x540] sm:$0xff]
    %v265 = vld [vmem:[#allocation5 + $0x548] sm:$0xff]
    %v266 = vld [vmem:[#allocation5 + $0x550] sm:$0xff]
    %v267 = vld [vmem:[#allocation5 + $0x558] sm:$0xff]
    %v268 = vld [vmem:[#allocation5 + $0x560] sm:$0xff]
    %v269 = vld [vmem:[#allocation5 + $0x568] sm:$0xff]
    %v270 = vld [vmem:[#allocation5 + $0x570] sm:$0xff]
    %v271 = vld [vmem:[#allocation5 + $0x578] sm:$0xff]
    %v272 = vld [vmem:[#allocation5 + $0x580] sm:$0xff]
    %v273 = vld [vmem:[#allocation5 + $0x588] sm:$0xff]
    %v274 = vld [vmem:[#allocation5 + $0x590] sm:$0xff]
    %v275 = vld [vmem:[#allocation5 + $0x598] sm:$0xff]
    %v276 = vld [vmem:[#allocation5 + $0x5a0] sm:$0xff]
    %v277 = vld [vmem:[#allocation5 + $0x5a8] sm:$0xff]
    %v278 = vld [vmem:[#allocation5 + $0x5b0] sm:$0xff]
    %v279 = vld [vmem:[#allocation5 + $0x5b8] sm:$0xff]
    %v280 = vld [vmem:[#allocation5 + $0x5c0] sm:$0xff]
    %v281 = vld [vmem:[#allocation5 + $0x5c8] sm:$0xff]
    %v282 = vld [vmem:[#allocation5 + $0x5d0] sm:$0xff]
    %v283 = vld [vmem:[#allocation5 + $0x5d8] sm:$0xff]
    %v284 = vld [vmem:[#allocation5 + $0x5e0] sm:$0xff]
    %v285 = vld [vmem:[#allocation5 + $0x5e8] sm:$0xff]
    %v286 = vld [vmem:[#allocation5 + $0x5f0] sm:$0xff]
    %v287 = vld [vmem:[#allocation5 + $0x5f8] sm:$0xff]
    %v288 = vld [vmem:[#allocation5 + $0x600] sm:$0xff]
    %v289 = vld [vmem:[#allocation5 + $0x608] sm:$0xff]
    %v290 = vld [vmem:[#allocation5 + $0x610] sm:$0xff]
    %v291 = vld [vmem:[#allocation5 + $0x618] sm:$0xff]
    %v292 = vld [vmem:[#allocation5 + $0x620] sm:$0xff]
    %v293 = vld [vmem:[#allocation5 + $0x628] sm:$0xff]
    %v294 = vld [vmem:[#allocation5 + $0x630] sm:$0xff]
    %v295 = vld [vmem:[#allocation5 + $0x638] sm:$0xff]
    %v296 = vld [vmem:[#allocation5 + $0x640] sm:$0xff]
    %v297 = vld [vmem:[#allocation5 + $0x648] sm:$0xff]
    %v298 = vld [vmem:[#allocation5 + $0x650] sm:$0xff]
    %v299 = vld [vmem:[#allocation5 + $0x658] sm:$0xff]
    %v300 = vld [vmem:[#allocation5 + $0x660] sm:$0xff]
    %v301 = vld [vmem:[#allocation5 + $0x668] sm:$0xff]
    %v302 = vld [vmem:[#allocation5 + $0x670] sm:$0xff]
    %v303 = vld [vmem:[#allocation5 + $0x678] sm:$0xff]
    %v304 = vld [vmem:[#allocation5 + $0x680] sm:$0xff]
    %v305 = vld [vmem:[#allocation5 + $0x688] sm:$0xff]
    %v306 = vld [vmem:[#allocation5 + $0x690] sm:$0xff]
    %v307 = vld [vmem:[#allocation5 + $0x698] sm:$0xff]
    %v308 = vld [vmem:[#allocation5 + $0x6a0] sm:$0xff]
    %v309 = vld [vmem:[#allocation5 + $0x6a8] sm:$0xff]
    %v310 = vld [vmem:[#allocation5 + $0x6b0] sm:$0xff]
    %v311 = vld [vmem:[#allocation5 + $0x6b8] sm:$0xff]
    %v312 = vld [vmem:[#allocation5 + $0x6c0] sm:$0xff]
    %v313 = vld [vmem:[#allocation5 + $0x6c8] sm:$0xff]
    %v314 = vld [vmem:[#allocation5 + $0x6d0] sm:$0xff]
    %v315 = vld [vmem:[#allocation5 + $0x6d8] sm:$0xff]
    %v316 = vld [vmem:[#allocation5 + $0x6e0] sm:$0xff]
    %v317 = vld [vmem:[#allocation5 + $0x6e8] sm:$0xff]
    %v318 = vld [vmem:[#allocation5 + $0x6f0] sm:$0xff]
    %v319 = vld [vmem:[#allocation5 + $0x6f8] sm:$0xff]
    %v320 = vld [vmem:[#allocation7] sm:$0xf]
    %v322 = vlaneseq
    %v323 = vshrl.u32 %v322, 7
    %v324 = vsub.s32 0, %v323
    %v325 = vrot.slane %v320, %v324
    %v326 = vlaneseq
    %v327 = vshrl.u32 %v326, 7
    %v328 = vsub.s32 1, %v327
    %v329 = vrot.slane %v320, %v328
    %v330 = vlaneseq
    %v331 = vshrl.u32 %v330, 7
    %v332 = vsub.s32 2, %v331
    %v333 = vrot.slane %v320, %v332
    %v334 = vlaneseq
    %v335 = vshrl.u32 %v334, 7
    %v336 = vsub.s32 3, %v335
    %v337 = vrot.slane %v320, %v336
    %v346 = vunpack.c.l.b16 %v92
    %v347 = vunpack.c.h.b16 %v92
    %v348 = vunpack.c.l.b16 %v93
    %v349 = vunpack.c.h.b16 %v93
    %v350 = vunpack.c.l.b16 %v94
    %v351 = vunpack.c.h.b16 %v94
    %v352 = vunpack.c.l.b16 %v95
    %v353 = vpack.c.b16 %v346, %v346
    %v354 = vpack.c.b16 %v347, %v347
    %v355 = vpack.c.b16 %v348, %v348
    %v356 = vpack.c.b16 %v349, %v349
    %v357 = vpack.c.b16 %v350, %v350
    %v358 = vpack.c.b16 %v351, %v351
    %v359 = vpack.c.b16 %v352, %v352
    %v591 = vunpack.c.l.b16 %v96
    %v592 = vunpack.c.h.b16 %v96
    %v593 = vunpack.c.l.b16 %v97
    %v594 = vunpack.c.h.b16 %v97
    %v595 = vunpack.c.l.b16 %v98
    %v596 = vunpack.c.h.b16 %v98
    %v597 = vunpack.c.l.b16 %v99
    %v598 = vunpack.c.h.b16 %v99
    %v599 = vunpack.c.l.b16 %v100
    %v600 = vunpack.c.h.b16 %v100
    %v601 = vunpack.c.l.b16 %v101
    %v602 = vunpack.c.h.b16 %v101
    %v603 = vunpack.c.l.b16 %v102
    %v604 = vunpack.c.h.b16 %v102
    %v605 = vunpack.c.l.b16 %v103
    %v606 = vunpack.c.h.b16 %v103
    %v607 = vunpack.c.l.b16 %v104
    %v608 = vunpack.c.h.b16 %v104
    %v609 = vunpack.c.l.b16 %v105
    %v610 = vunpack.c.h.b16 %v105
    %v611 = vunpack.c.l.b16 %v106
    %v612 = vunpack.c.h.b16 %v106
    %v613 = vunpack.c.l.b16 %v107
    %v614 = vunpack.c.h.b16 %v107
    %v615 = vunpack.c.l.b16 %v108
    %v616 = vunpack.c.h.b16 %v108
    %v617 = vunpack.c.l.b16 %v109
    %v618 = vunpack.c.h.b16 %v109
    %v619 = vunpack.c.l.b16 %v110
    %v620 = vunpack.c.h.b16 %v110
    %v621 = vunpack.c.l.b16 %v111
    %v622 = vunpack.c.h.b16 %v111
    %v623 = vunpack.c.l.b16 %v112
    %v624 = vunpack.c.h.b16 %v112
    %v625 = vunpack.c.l.b16 %v113
    %v626 = vunpack.c.h.b16 %v113
    %v627 = vunpack.c.l.b16 %v114
    %v628 = vunpack.c.h.b16 %v114
    %v629 = vunpack.c.l.b16 %v115
    %v630 = vunpack.c.h.b16 %v115
    %v631 = vunpack.c.l.b16 %v116
    %v632 = vunpack.c.h.b16 %v116
    %v633 = vunpack.c.l.b16 %v117
    %v634 = vunpack.c.h.b16 %v117
    %v635 = vunpack.c.l.b16 %v118
    %v636 = vunpack.c.h.b16 %v118
    %v637 = vunpack.c.l.b16 %v119
    %v638 = vunpack.c.h.b16 %v119
    %v639 = vunpack.c.l.b16 %v120
    %v640 = vunpack.c.h.b16 %v120
    %v641 = vunpack.c.l.b16 %v121
    %v642 = vunpack.c.h.b16 %v121
    %v643 = vunpack.c.l.b16 %v122
    %v644 = vunpack.c.h.b16 %v122
    %v645 = vunpack.c.l.b16 %v123
    %v646 = vunpack.c.h.b16 %v123
    %v647 = vunpack.c.l.b16 %v124
    %v648 = vunpack.c.h.b16 %v124
    %v649 = vunpack.c.l.b16 %v125
    %v650 = vunpack.c.h.b16 %v125
    %v651 = vunpack.c.l.b16 %v126
    %v652 = vunpack.c.h.b16 %v126
    %v653 = vunpack.c.l.b16 %v127
    %v654 = vunpack.c.h.b16 %v127
    %v655 = vunpack.c.l.b16 %v128
    %v656 = vunpack.c.h.b16 %v128
    %v657 = vunpack.c.l.b16 %v129
    %v658 = vunpack.c.h.b16 %v129
    %v659 = vunpack.c.l.b16 %v130
    %v660 = vunpack.c.h.b16 %v130
    %v661 = vunpack.c.l.b16 %v131
    %v662 = vunpack.c.h.b16 %v131
    %v663 = vunpack.c.l.b16 %v132
    %v664 = vunpack.c.h.b16 %v132
    %v665 = vunpack.c.l.b16 %v133
    %v666 = vunpack.c.h.b16 %v133
    %v667 = vunpack.c.l.b16 %v134
    %v668 = vunpack.c.h.b16 %v134
    %v669 = vunpack.c.l.b16 %v135
    %v670 = vunpack.c.h.b16 %v135
    %v671 = vunpack.c.l.b16 %v136
    %v672 = vunpack.c.h.b16 %v136
    %v673 = vunpack.c.l.b16 %v137
    %v674 = vunpack.c.h.b16 %v137
    %v675 = vunpack.c.l.b16 %v138
    %v676 = vunpack.c.h.b16 %v138
    %v677 = vunpack.c.l.b16 %v139
    %v678 = vunpack.c.h.b16 %v139
    %v679 = vunpack.c.l.b16 %v140
    %v680 = vunpack.c.h.b16 %v140
    %v681 = vunpack.c.l.b16 %v141
    %v682 = vunpack.c.h.b16 %v141
    %v683 = vunpack.c.l.b16 %v142
    %v684 = vunpack.c.h.b16 %v142
    %v685 = vunpack.c.l.b16 %v143
    %v686 = vunpack.c.h.b16 %v143
    %v687 = vunpack.c.l.b16 %v144
    %v688 = vunpack.c.h.b16 %v144
    %v689 = vunpack.c.l.b16 %v145
    %v690 = vunpack.c.h.b16 %v145
    %v691 = vunpack.c.l.b16 %v146
    %v692 = vunpack.c.h.b16 %v146
    %v693 = vunpack.c.l.b16 %v147
    %v694 = vunpack.c.h.b16 %v147
    %v695 = vunpack.c.l.b16 %v148
    %v696 = vunpack.c.h.b16 %v148
    %v697 = vunpack.c.l.b16 %v149
    %v698 = vunpack.c.h.b16 %v149
    %v699 = vunpack.c.l.b16 %v150
    %v700 = vunpack.c.h.b16 %v150
    %v701 = vunpack.c.l.b16 %v151
    %v702 = vunpack.c.h.b16 %v151
    %v703 = vunpack.c.l.b16 %v152
    %v704 = vunpack.c.h.b16 %v152
    %v705 = vunpack.c.l.b16 %v153
    %v706 = vunpack.c.h.b16 %v153
    %v707 = vunpack.c.l.b16 %v154
    %v708 = vunpack.c.h.b16 %v154
    %v709 = vunpack.c.l.b16 %v155
    %v710 = vunpack.c.h.b16 %v155
    %v711 = vunpack.c.l.b16 %v156
    %v712 = vunpack.c.h.b16 %v156
    %v713 = vunpack.c.l.b16 %v157
    %v714 = vunpack.c.h.b16 %v157
    %v715 = vunpack.c.l.b16 %v158
    %v716 = vunpack.c.h.b16 %v158
    %v717 = vunpack.c.l.b16 %v159
    %v718 = vunpack.c.h.b16 %v159
    %v719 = vunpack.c.l.b16 %v160
    %v720 = vunpack.c.h.b16 %v160
    %v721 = vunpack.c.l.b16 %v161
    %v722 = vunpack.c.h.b16 %v161
    %v723 = vunpack.c.l.b16 %v162
    %v724 = vunpack.c.h.b16 %v162
    %v725 = vunpack.c.l.b16 %v163
    %v726 = vunpack.c.h.b16 %v163
    %v727 = vunpack.c.l.b16 %v164
    %v728 = vunpack.c.h.b16 %v164
    %v729 = vunpack.c.l.b16 %v165
    %v730 = vunpack.c.h.b16 %v165
    %v731 = vunpack.c.l.b16 %v166
    %v732 = vunpack.c.h.b16 %v166
    %v733 = vunpack.c.l.b16 %v167
    %v734 = vunpack.c.h.b16 %v167
    %v735 = vunpack.c.l.b16 %v168
    %v736 = vunpack.c.h.b16 %v168
    %v737 = vunpack.c.l.b16 %v169
    %v738 = vunpack.c.h.b16 %v169
    %v739 = vunpack.c.l.b16 %v170
    %v740 = vunpack.c.h.b16 %v170
    %v741 = vunpack.c.l.b16 %v171
    %v742 = vunpack.c.h.b16 %v171
    %v743 = vunpack.c.l.b16 %v172
    %v744 = vunpack.c.h.b16 %v172
    %v745 = vunpack.c.l.b16 %v173
    %v746 = vunpack.c.h.b16 %v173
    %v747 = vunpack.c.l.b16 %v174
    %v748 = vunpack.c.h.b16 %v174
    %v749 = vunpack.c.l.b16 %v175
    %v750 = vunpack.c.h.b16 %v175
    %v751 = vunpack.c.l.b16 %v176
    %v752 = vunpack.c.h.b16 %v176
    %v753 = vunpack.c.l.b16 %v177
    %v754 = vunpack.c.h.b16 %v177
    %v755 = vunpack.c.l.b16 %v178
    %v756 = vunpack.c.h.b16 %v178
    %v757 = vunpack.c.l.b16 %v179
    %v758 = vunpack.c.h.b16 %v179
    %v759 = vunpack.c.l.b16 %v180
    %v760 = vunpack.c.h.b16 %v180
    %v761 = vunpack.c.l.b16 %v181
    %v762 = vunpack.c.h.b16 %v181
    %v763 = vunpack.c.l.b16 %v182
    %v764 = vunpack.c.h.b16 %v182
    %v765 = vunpack.c.l.b16 %v183
    %v766 = vunpack.c.h.b16 %v183
    %v767 = vunpack.c.l.b16 %v184
    %v768 = vunpack.c.h.b16 %v184
    %v769 = vunpack.c.l.b16 %v185
    %v770 = vunpack.c.h.b16 %v185
    %v771 = vunpack.c.l.b16 %v186
    %v772 = vunpack.c.h.b16 %v186
    %v773 = vunpack.c.l.b16 %v187
    %v774 = vunpack.c.h.b16 %v187
    %v775 = vunpack.c.l.b16 %v188
    %v776 = vunpack.c.h.b16 %v188
    %v777 = vunpack.c.l.b16 %v189
    %v778 = vunpack.c.h.b16 %v189
    %v779 = vunpack.c.l.b16 %v190
    %v780 = vunpack.c.h.b16 %v190
    %v781 = vunpack.c.l.b16 %v191
    %v782 = vunpack.c.h.b16 %v191
    %v783 = vunpack.c.l.b16 %v192
    %v784 = vunpack.c.h.b16 %v192
    %v785 = vunpack.c.l.b16 %v193
    %v786 = vunpack.c.h.b16 %v193
    %v787 = vunpack.c.l.b16 %v194
    %v788 = vunpack.c.h.b16 %v194
    %v789 = vunpack.c.l.b16 %v195
    %v790 = vunpack.c.h.b16 %v195
    %v791 = vunpack.c.l.b16 %v196
    %v792 = vunpack.c.h.b16 %v196
    %v793 = vunpack.c.l.b16 %v197
    %v794 = vunpack.c.h.b16 %v197
    %v795 = vunpack.c.l.b16 %v198
    %v796 = vunpack.c.h.b16 %v198
    %v797 = vunpack.c.l.b16 %v199
    %v798 = vunpack.c.h.b16 %v199
    %v799 = vunpack.c.l.b16 %v200
    %v800 = vunpack.c.h.b16 %v200
    %v801 = vunpack.c.l.b16 %v201
    %v802 = vunpack.c.h.b16 %v201
    %v803 = vunpack.c.l.b16 %v202
    %v804 = vunpack.c.h.b16 %v202
    %v805 = vunpack.c.l.b16 %v203
    %v806 = vunpack.c.h.b16 %v203
    %v807 = vunpack.c.l.b16 %v204
    %v808 = vunpack.c.h.b16 %v204
    %v809 = vunpack.c.l.b16 %v205
    %v810 = vunpack.c.h.b16 %v205
    %v811 = vunpack.c.l.b16 %v206
    %v812 = vunpack.c.h.b16 %v206
    %v813 = vunpack.c.l.b16 %v207
    %v814 = vunpack.c.h.b16 %v207
    %v815 = vunpack.c.l.b16 %v208
    %v816 = vunpack.c.h.b16 %v208
    %v817 = vunpack.c.l.b16 %v209
    %v818 = vunpack.c.h.b16 %v209
    %v819 = vunpack.c.l.b16 %v210
    %v820 = vunpack.c.h.b16 %v210
    %v821 = vunpack.c.l.b16 %v211
    %v822 = vunpack.c.h.b16 %v211
    %v823 = vunpack.c.l.b16 %v212
    %v824 = vunpack.c.h.b16 %v212
    %v825 = vunpack.c.l.b16 %v213
    %v826 = vunpack.c.h.b16 %v213
    %v827 = vunpack.c.l.b16 %v214
    %v828 = vunpack.c.h.b16 %v214
    %v829 = vunpack.c.l.b16 %v215
    %v830 = vunpack.c.h.b16 %v215
    %v831 = vunpack.c.l.b16 %v216
    %v832 = vunpack.c.h.b16 %v216
    %v833 = vunpack.c.l.b16 %v217
    %v834 = vunpack.c.h.b16 %v217
    %v835 = vunpack.c.l.b16 %v218
    %v836 = vunpack.c.h.b16 %v218
    %v837 = vunpack.c.l.b16 %v219
    %v838 = vunpack.c.h.b16 %v219
    %v839 = vunpack.c.l.b16 %v220
    %v840 = vunpack.c.h.b16 %v220
    %v841 = vunpack.c.l.b16 %v221
    %v842 = vunpack.c.h.b16 %v221
    %v843 = vunpack.c.l.b16 %v222
    %v844 = vunpack.c.h.b16 %v222
    %v845 = vunpack.c.l.b16 %v223
    %v846 = vunpack.c.h.b16 %v223
    %v847 = vunpack.c.l.b16 %v224
    %v848 = vunpack.c.h.b16 %v224
    %v849 = vunpack.c.l.b16 %v225
    %v850 = vunpack.c.h.b16 %v225
    %v851 = vunpack.c.l.b16 %v226
    %v852 = vunpack.c.h.b16 %v226
    %v853 = vunpack.c.l.b16 %v227
    %v854 = vunpack.c.h.b16 %v227
    %v855 = vunpack.c.l.b16 %v228
    %v856 = vunpack.c.h.b16 %v228
    %v857 = vunpack.c.l.b16 %v229
    %v858 = vunpack.c.h.b16 %v229
    %v859 = vunpack.c.l.b16 %v230
    %v860 = vunpack.c.h.b16 %v230
    %v861 = vunpack.c.l.b16 %v231
    %v862 = vunpack.c.h.b16 %v231
    %v863 = vunpack.c.l.b16 %v232
    %v864 = vunpack.c.h.b16 %v232
    %v865 = vunpack.c.l.b16 %v233
    %v866 = vunpack.c.h.b16 %v233
    %v867 = vunpack.c.l.b16 %v234
    %v868 = vunpack.c.h.b16 %v234
    %v869 = vunpack.c.l.b16 %v235
    %v870 = vunpack.c.h.b16 %v235
    %v871 = vunpack.c.l.b16 %v236
    %v872 = vunpack.c.h.b16 %v236
    %v873 = vunpack.c.l.b16 %v237
    %v874 = vunpack.c.h.b16 %v237
    %v875 = vunpack.c.l.b16 %v238
    %v876 = vunpack.c.h.b16 %v238
    %v877 = vunpack.c.l.b16 %v239
    %v878 = vunpack.c.h.b16 %v239
    %v879 = vunpack.c.l.b16 %v240
    %v880 = vunpack.c.h.b16 %v240
    %v881 = vunpack.c.l.b16 %v241
    %v882 = vunpack.c.h.b16 %v241
    %v883 = vunpack.c.l.b16 %v242
    %v884 = vunpack.c.h.b16 %v242
    %v885 = vunpack.c.l.b16 %v243
    %v886 = vunpack.c.h.b16 %v243
    %v887 = vunpack.c.l.b16 %v244
    %v888 = vunpack.c.h.b16 %v244
    %v889 = vunpack.c.l.b16 %v245
    %v890 = vunpack.c.h.b16 %v245
    %v891 = vunpack.c.l.b16 %v246
    %v892 = vunpack.c.h.b16 %v246
    %v893 = vunpack.c.l.b16 %v247
    %v894 = vunpack.c.h.b16 %v247
    %v895 = vunpack.c.l.b16 %v248
    %v896 = vunpack.c.h.b16 %v248
    %v897 = vunpack.c.l.b16 %v249
    %v898 = vunpack.c.h.b16 %v249
    %v899 = vunpack.c.l.b16 %v250
    %v900 = vunpack.c.h.b16 %v250
    %v901 = vunpack.c.l.b16 %v251
    %v902 = vunpack.c.h.b16 %v251
    %v903 = vunpack.c.l.b16 %v252
    %v904 = vunpack.c.h.b16 %v252
    %v905 = vunpack.c.l.b16 %v253
    %v906 = vunpack.c.h.b16 %v253
    %v907 = vunpack.c.l.b16 %v254
    %v908 = vunpack.c.h.b16 %v254
    %v909 = vunpack.c.l.b16 %v255
    %v910 = vunpack.c.h.b16 %v255
    %v911 = vunpack.c.l.b16 %v256
    %v912 = vunpack.c.h.b16 %v256
    %v913 = vunpack.c.l.b16 %v257
    %v914 = vunpack.c.h.b16 %v257
    %v915 = vunpack.c.l.b16 %v258
    %v916 = vunpack.c.h.b16 %v258
    %v917 = vunpack.c.l.b16 %v259
    %v918 = vunpack.c.h.b16 %v259
    %v919 = vunpack.c.l.b16 %v260
    %v920 = vunpack.c.h.b16 %v260
    %v921 = vunpack.c.l.b16 %v261
    %v922 = vunpack.c.h.b16 %v261
    %v923 = vunpack.c.l.b16 %v262
    %v924 = vunpack.c.h.b16 %v262
    %v925 = vunpack.c.l.b16 %v263
    %v926 = vunpack.c.h.b16 %v263
    %v927 = vunpack.c.l.b16 %v264
    %v928 = vunpack.c.h.b16 %v264
    %v929 = vunpack.c.l.b16 %v265
    %v930 = vunpack.c.h.b16 %v265
    %v931 = vunpack.c.l.b16 %v266
    %v932 = vunpack.c.h.b16 %v266
    %v933 = vunpack.c.l.b16 %v267
    %v934 = vunpack.c.h.b16 %v267
    %v935 = vunpack.c.l.b16 %v268
    %v936 = vunpack.c.h.b16 %v268
    %v937 = vunpack.c.l.b16 %v269
    %v938 = vunpack.c.h.b16 %v269
    %v939 = vunpack.c.l.b16 %v270
    %v940 = vunpack.c.h.b16 %v270
    %v941 = vunpack.c.l.b16 %v271
    %v942 = vunpack.c.h.b16 %v271
    %v943 = vunpack.c.l.b16 %v272
    %v944 = vunpack.c.h.b16 %v272
    %v945 = vunpack.c.l.b16 %v273
    %v946 = vunpack.c.h.b16 %v273
    %v947 = vunpack.c.l.b16 %v274
    %v948 = vunpack.c.h.b16 %v274
    %v949 = vunpack.c.l.b16 %v275
    %v950 = vunpack.c.h.b16 %v275
    %v951 = vunpack.c.l.b16 %v276
    %v952 = vunpack.c.h.b16 %v276
    %v953 = vunpack.c.l.b16 %v277
    %v954 = vunpack.c.h.b16 %v277
    %v955 = vunpack.c.l.b16 %v278
    %v956 = vunpack.c.h.b16 %v278
    %v957 = vunpack.c.l.b16 %v279
    %v958 = vunpack.c.h.b16 %v279
    %v959 = vunpack.c.l.b16 %v280
    %v960 = vunpack.c.h.b16 %v280
    %v961 = vunpack.c.l.b16 %v281
    %v962 = vunpack.c.h.b16 %v281
    %v963 = vunpack.c.l.b16 %v282
    %v964 = vunpack.c.h.b16 %v282
    %v965 = vunpack.c.l.b16 %v283
    %v966 = vunpack.c.h.b16 %v283
    %v967 = vunpack.c.l.b16 %v284
    %v968 = vunpack.c.h.b16 %v284
    %v969 = vunpack.c.l.b16 %v285
    %v970 = vunpack.c.h.b16 %v285
    %v971 = vunpack.c.l.b16 %v286
    %v972 = vunpack.c.h.b16 %v286
    %v973 = vunpack.c.l.b16 %v287
    %v974 = vunpack.c.h.b16 %v287
    %v975 = vunpack.c.l.b16 %v288
    %v976 = vunpack.c.h.b16 %v288
    %v977 = vunpack.c.l.b16 %v289
    %v978 = vunpack.c.h.b16 %v289
    %v979 = vunpack.c.l.b16 %v290
    %v980 = vunpack.c.h.b16 %v290
    %v981 = vunpack.c.l.b16 %v291
    %v982 = vunpack.c.h.b16 %v291
    %v983 = vunpack.c.l.b16 %v292
    %v984 = vunpack.c.h.b16 %v292
    %v985 = vunpack.c.l.b16 %v293
    %v986 = vunpack.c.h.b16 %v293
    %v987 = vunpack.c.l.b16 %v294
    %v988 = vunpack.c.h.b16 %v294
    %v989 = vunpack.c.l.b16 %v295
    %v990 = vunpack.c.h.b16 %v295
    %v991 = vunpack.c.l.b16 %v296
    %v992 = vunpack.c.h.b16 %v296
    %v993 = vunpack.c.l.b16 %v297
    %v994 = vunpack.c.h.b16 %v297
    %v995 = vunpack.c.l.b16 %v298
    %v996 = vunpack.c.h.b16 %v298
    %v997 = vunpack.c.l.b16 %v299
    %v998 = vunpack.c.h.b16 %v299
    %v999 = vunpack.c.l.b16 %v300
    %v1000 = vunpack.c.h.b16 %v300
    %v1001 = vunpack.c.l.b16 %v301
    %v1002 = vunpack.c.h.b16 %v301
    %v1003 = vunpack.c.l.b16 %v302
    %v1004 = vunpack.c.h.b16 %v302
    %v1005 = vunpack.c.l.b16 %v303
    %v1006 = vunpack.c.h.b16 %v303
    %v1007 = vunpack.c.l.b16 %v304
    %v1008 = vunpack.c.h.b16 %v304
    %v1009 = vunpack.c.l.b16 %v305
    %v1010 = vunpack.c.h.b16 %v305
    %v1011 = vunpack.c.l.b16 %v306
    %v1012 = vunpack.c.h.b16 %v306
    %v1013 = vunpack.c.l.b16 %v307
    %v1014 = vunpack.c.h.b16 %v307
    %v1015 = vunpack.c.l.b16 %v308
    %v1016 = vunpack.c.h.b16 %v308
    %v1017 = vunpack.c.l.b16 %v309
    %v1018 = vunpack.c.h.b16 %v309
    %v1019 = vunpack.c.l.b16 %v310
    %v1020 = vunpack.c.h.b16 %v310
    %v1021 = vunpack.c.l.b16 %v311
    %v1022 = vunpack.c.h.b16 %v311
    %v1023 = vunpack.c.l.b16 %v312
    %v1024 = vunpack.c.h.b16 %v312
    %v1025 = vunpack.c.l.b16 %v313
    %v1026 = vunpack.c.h.b16 %v313
    %v1027 = vunpack.c.l.b16 %v314
    %v1028 = vunpack.c.h.b16 %v314
    %v1029 = vunpack.c.l.b16 %v315
    %v1030 = vunpack.c.h.b16 %v315
    %v1031 = vunpack.c.l.b16 %v316
    %v1032 = vunpack.c.h.b16 %v316
    %v1033 = vunpack.c.l.b16 %v317
    %v1034 = vunpack.c.h.b16 %v317
    %v1035 = vunpack.c.l.b16 %v318
    %v1036 = vunpack.c.h.b16 %v318
    %v1037 = vunpack.c.l.b16 %v319
    %v1038 = vunpack.c.h.b16 %v319
    %v1039 = vpack.c.b16 %v595, %v591
    %v1040 = vpack.c.b16 %v596, %v592
    %v1041 = vpack.c.b16 %v597, %v593
    %v1042 = vpack.c.b16 %v598, %v594
    %v1043 = vpack.c.b16 %v603, %v599
    %v1044 = vpack.c.b16 %v604, %v600
    %v1045 = vpack.c.b16 %v605, %v601
    %v1046 = vpack.c.b16 %v606, %v602
    %v1047 = vpack.c.b16 %v611, %v607
    %v1048 = vpack.c.b16 %v612, %v608
    %v1049 = vpack.c.b16 %v613, %v609
    %v1050 = vpack.c.b16 %v614, %v610
    %v1051 = vpack.c.b16 %v619, %v615
    %v1052 = vpack.c.b16 %v620, %v616
    %v1053 = vpack.c.b16 %v621, %v617
    %v1054 = vpack.c.b16 %v622, %v618
    %v1055 = vpack.c.b16 %v627, %v623
    %v1056 = vpack.c.b16 %v628, %v624
    %v1057 = vpack.c.b16 %v629, %v625
    %v1058 = vpack.c.b16 %v630, %v626
    %v1059 = vpack.c.b16 %v635, %v631
    %v1060 = vpack.c.b16 %v636, %v632
    %v1061 = vpack.c.b16 %v637, %v633
    %v1062 = vpack.c.b16 %v638, %v634
    %v1063 = vpack.c.b16 %v643, %v639
    %v1064 = vpack.c.b16 %v644, %v640
    %v1065 = vpack.c.b16 %v645, %v641
    %v1066 = vpack.c.b16 %v646, %v642
    %v1067 = vpack.c.b16 %v651, %v647
    %v1068 = vpack.c.b16 %v652, %v648
    %v1069 = vpack.c.b16 %v653, %v649
    %v1070 = vpack.c.b16 %v654, %v650
    %v1071 = vpack.c.b16 %v659, %v655
    %v1072 = vpack.c.b16 %v660, %v656
    %v1073 = vpack.c.b16 %v661, %v657
    %v1074 = vpack.c.b16 %v662, %v658
    %v1075 = vpack.c.b16 %v667, %v663
    %v1076 = vpack.c.b16 %v668, %v664
    %v1077 = vpack.c.b16 %v669, %v665
    %v1078 = vpack.c.b16 %v670, %v666
    %v1079 = vpack.c.b16 %v675, %v671
    %v1080 = vpack.c.b16 %v676, %v672
    %v1081 = vpack.c.b16 %v677, %v673
    %v1082 = vpack.c.b16 %v678, %v674
    %v1083 = vpack.c.b16 %v683, %v679
    %v1084 = vpack.c.b16 %v684, %v680
    %v1085 = vpack.c.b16 %v685, %v681
    %v1086 = vpack.c.b16 %v686, %v682
    %v1087 = vpack.c.b16 %v691, %v687
    %v1088 = vpack.c.b16 %v692, %v688
    %v1089 = vpack.c.b16 %v693, %v689
    %v1090 = vpack.c.b16 %v694, %v690
    %v1091 = vpack.c.b16 %v699, %v695
    %v1092 = vpack.c.b16 %v700, %v696
    %v1093 = vpack.c.b16 %v701, %v697
    %v1094 = vpack.c.b16 %v702, %v698
    %v1095 = vpack.c.b16 %v707, %v703
    %v1096 = vpack.c.b16 %v708, %v704
    %v1097 = vpack.c.b16 %v709, %v705
    %v1098 = vpack.c.b16 %v710, %v706
    %v1099 = vpack.c.b16 %v715, %v711
    %v1100 = vpack.c.b16 %v716, %v712
    %v1101 = vpack.c.b16 %v717, %v713
    %v1102 = vpack.c.b16 %v718, %v714
    %v1103 = vpack.c.b16 %v723, %v719
    %v1104 = vpack.c.b16 %v724, %v720
    %v1105 = vpack.c.b16 %v725, %v721
    %v1106 = vpack.c.b16 %v726, %v722
    %v1107 = vpack.c.b16 %v731, %v727
    %v1108 = vpack.c.b16 %v732, %v728
    %v1109 = vpack.c.b16 %v733, %v729
    %v1110 = vpack.c.b16 %v734, %v730
    %v1111 = vpack.c.b16 %v739, %v735
    %v1112 = vpack.c.b16 %v740, %v736
    %v1113 = vpack.c.b16 %v741, %v737
    %v1114 = vpack.c.b16 %v742, %v738
    %v1115 = vpack.c.b16 %v747, %v743
    %v1116 = vpack.c.b16 %v748, %v744
    %v1117 = vpack.c.b16 %v749, %v745
    %v1118 = vpack.c.b16 %v750, %v746
    %v1119 = vpack.c.b16 %v755, %v751
    %v1120 = vpack.c.b16 %v756, %v752
    %v1121 = vpack.c.b16 %v757, %v753
    %v1122 = vpack.c.b16 %v758, %v754
    %v1123 = vpack.c.b16 %v763, %v759
    %v1124 = vpack.c.b16 %v764, %v760
    %v1125 = vpack.c.b16 %v765, %v761
    %v1126 = vpack.c.b16 %v766, %v762
    %v1127 = vpack.c.b16 %v771, %v767
    %v1128 = vpack.c.b16 %v772, %v768
    %v1129 = vpack.c.b16 %v773, %v769
    %v1130 = vpack.c.b16 %v774, %v770
    %v1131 = vpack.c.b16 %v779, %v775
    %v1132 = vpack.c.b16 %v780, %v776
    %v1133 = vpack.c.b16 %v781, %v777
    %v1134 = vpack.c.b16 %v782, %v778
    %v1135 = vpack.c.b16 %v787, %v783
    %v1136 = vpack.c.b16 %v788, %v784
    %v1137 = vpack.c.b16 %v789, %v785
    %v1138 = vpack.c.b16 %v790, %v786
    %v1139 = vpack.c.b16 %v795, %v791
    %v1140 = vpack.c.b16 %v796, %v792
    %v1141 = vpack.c.b16 %v797, %v793
    %v1142 = vpack.c.b16 %v798, %v794
    %v1143 = vpack.c.b16 %v803, %v799
    %v1144 = vpack.c.b16 %v804, %v800
    %v1145 = vpack.c.b16 %v805, %v801
    %v1146 = vpack.c.b16 %v806, %v802
    %v1147 = vpack.c.b16 %v811, %v807
    %v1148 = vpack.c.b16 %v812, %v808
    %v1149 = vpack.c.b16 %v813, %v809
    %v1150 = vpack.c.b16 %v814, %v810
    %v1151 = vpack.c.b16 %v819, %v815
    %v1152 = vpack.c.b16 %v820, %v816
    %v1153 = vpack.c.b16 %v821, %v817
    %v1154 = vpack.c.b16 %v822, %v818
    %v1155 = vpack.c.b16 %v827, %v823
    %v1156 = vpack.c.b16 %v828, %v824
    %v1157 = vpack.c.b16 %v829, %v825
    %v1158 = vpack.c.b16 %v830, %v826
    %v1159 = vpack.c.b16 %v835, %v831
    %v1160 = vpack.c.b16 %v836, %v832
    %v1161 = vpack.c.b16 %v837, %v833
    %v1162 = vpack.c.b16 %v838, %v834
    %v1163 = vpack.c.b16 %v843, %v839
    %v1164 = vpack.c.b16 %v844, %v840
    %v1165 = vpack.c.b16 %v845, %v841
    %v1166 = vpack.c.b16 %v846, %v842
    %v1167 = vpack.c.b16 %v851, %v847
    %v1168 = vpack.c.b16 %v852, %v848
    %v1169 = vpack.c.b16 %v853, %v849
    %v1170 = vpack.c.b16 %v854, %v850
    %v1171 = vpack.c.b16 %v859, %v855
    %v1172 = vpack.c.b16 %v860, %v856
    %v1173 = vpack.c.b16 %v861, %v857
    %v1174 = vpack.c.b16 %v862, %v858
    %v1175 = vpack.c.b16 %v867, %v863
    %v1176 = vpack.c.b16 %v868, %v864
    %v1177 = vpack.c.b16 %v869, %v865
    %v1178 = vpack.c.b16 %v870, %v866
    %v1179 = vpack.c.b16 %v875, %v871
    %v1180 = vpack.c.b16 %v876, %v872
    %v1181 = vpack.c.b16 %v877, %v873
    %v1182 = vpack.c.b16 %v878, %v874
    %v1183 = vpack.c.b16 %v883, %v879
    %v1184 = vpack.c.b16 %v884, %v880
    %v1185 = vpack.c.b16 %v885, %v881
    %v1186 = vpack.c.b16 %v886, %v882
    %v1187 = vpack.c.b16 %v891, %v887
    %v1188 = vpack.c.b16 %v892, %v888
    %v1189 = vpack.c.b16 %v893, %v889
    %v1190 = vpack.c.b16 %v894, %v890
    %v1191 = vpack.c.b16 %v899, %v895
    %v1192 = vpack.c.b16 %v900, %v896
    %v1193 = vpack.c.b16 %v901, %v897
    %v1194 = vpack.c.b16 %v902, %v898
    %v1195 = vpack.c.b16 %v907, %v903
    %v1196 = vpack.c.b16 %v908, %v904
    %v1197 = vpack.c.b16 %v909, %v905
    %v1198 = vpack.c.b16 %v910, %v906
    %v1199 = vpack.c.b16 %v915, %v911
    %v1200 = vpack.c.b16 %v916, %v912
    %v1201 = vpack.c.b16 %v917, %v913
    %v1202 = vpack.c.b16 %v918, %v914
    %v1203 = vpack.c.b16 %v923, %v919
    %v1204 = vpack.c.b16 %v924, %v920
    %v1205 = vpack.c.b16 %v925, %v921
    %v1206 = vpack.c.b16 %v926, %v922
    %v1207 = vpack.c.b16 %v931, %v927
    %v1208 = vpack.c.b16 %v932, %v928
    %v1209 = vpack.c.b16 %v933, %v929
    %v1210 = vpack.c.b16 %v934, %v930
    %v1211 = vpack.c.b16 %v939, %v935
    %v1212 = vpack.c.b16 %v940, %v936
    %v1213 = vpack.c.b16 %v941, %v937
    %v1214 = vpack.c.b16 %v942, %v938
    %v1215 = vpack.c.b16 %v947, %v943
    %v1216 = vpack.c.b16 %v948, %v944
    %v1217 = vpack.c.b16 %v949, %v945
    %v1218 = vpack.c.b16 %v950, %v946
    %v1219 = vpack.c.b16 %v955, %v951
    %v1220 = vpack.c.b16 %v956, %v952
    %v1221 = vpack.c.b16 %v957, %v953
    %v1222 = vpack.c.b16 %v958, %v954
    %v1223 = vpack.c.b16 %v963, %v959
    %v1224 = vpack.c.b16 %v964, %v960
    %v1225 = vpack.c.b16 %v965, %v961
    %v1226 = vpack.c.b16 %v966, %v962
    %v1227 = vpack.c.b16 %v971, %v967
    %v1228 = vpack.c.b16 %v972, %v968
    %v1229 = vpack.c.b16 %v973, %v969
    %v1230 = vpack.c.b16 %v974, %v970
    %v1231 = vpack.c.b16 %v979, %v975
    %v1232 = vpack.c.b16 %v980, %v976
    %v1233 = vpack.c.b16 %v981, %v977
    %v1234 = vpack.c.b16 %v982, %v978
    %v1235 = vpack.c.b16 %v987, %v983
    %v1236 = vpack.c.b16 %v988, %v984
    %v1237 = vpack.c.b16 %v989, %v985
    %v1238 = vpack.c.b16 %v990, %v986
    %v1239 = vpack.c.b16 %v995, %v991
    %v1240 = vpack.c.b16 %v996, %v992
    %v1241 = vpack.c.b16 %v997, %v993
    %v1242 = vpack.c.b16 %v998, %v994
    %v1243 = vpack.c.b16 %v1003, %v999
    %v1244 = vpack.c.b16 %v1004, %v1000
    %v1245 = vpack.c.b16 %v1005, %v1001
    %v1246 = vpack.c.b16 %v1006, %v1002
    %v1247 = vpack.c.b16 %v1011, %v1007
    %v1248 = vpack.c.b16 %v1012, %v1008
    %v1249 = vpack.c.b16 %v1013, %v1009
    %v1250 = vpack.c.b16 %v1014, %v1010
    %v1251 = vpack.c.b16 %v1019, %v1015
    %v1252 = vpack.c.b16 %v1020, %v1016
    %v1253 = vpack.c.b16 %v1021, %v1017
    %v1254 = vpack.c.b16 %v1022, %v1018
    %v1255 = vpack.c.b16 %v1027, %v1023
    %v1256 = vpack.c.b16 %v1028, %v1024
    %v1257 = vpack.c.b16 %v1029, %v1025
    %v1258 = vpack.c.b16 %v1030, %v1026
    %v1259 = vpack.c.b16 %v1035, %v1031
    %v1260 = vpack.c.b16 %v1036, %v1032
    %v1261 = vpack.c.b16 %v1037, %v1033
    %v1262 = vpack.c.b16 %v1038, %v1034
    %1487 = vmatprep.subr.bf16.mxu0 %v1068
    %1488 = vmatpush1.bf16.msra.mxu0 %v1067
    %1489 = vmatprep.subr.bf16.mxu0 %v1064
    %1490 = vmatpush1.bf16.msra.mxu0 %v1063
    %1491 = vmatprep.subr.bf16.mxu0 %v1060
    %1492 = vmatpush1.bf16.msra.mxu0 %v1059
    %1493 = vmatprep.subr.bf16.mxu0 %v1056
    %1494 = vmatpush1.bf16.msra.mxu0 %v1055
    %1495 = vmatprep.subr.bf16.mxu0 %v1052
    %1496 = vmatpush1.bf16.msra.mxu0 %v1051
    %1497 = vmatprep.subr.bf16.mxu0 %v1048
    %1498 = vmatpush1.bf16.msra.mxu0 %v1047
    %1499 = vmatprep.subr.bf16.mxu0 %v1044
    %1500 = vmatpush1.bf16.msra.mxu0 %v1043
    %1501 = vmatprep.subr.bf16.mxu0 %v1040
    %1502 = vmatpush1.bf16.msra.mxu0 %v1039
    %1503 = vmatprep.subr.bf16.mxu0 %v1100
    %1504 = vmatpush2.bf16.msra.mxu0 %v1099
    %1505 = vmatprep.subr.bf16.mxu0 %v1096
    %1506 = vmatpush2.bf16.msra.mxu0 %v1095
    %1507 = vmatprep.subr.bf16.mxu0 %v1092
    %1508 = vmatpush2.bf16.msra.mxu0 %v1091
    %1509 = vmatprep.subr.bf16.mxu0 %v1088
    %1510 = vmatpush2.bf16.msra.mxu0 %v1087
    %1511 = vmatprep.subr.bf16.mxu0 %v1084
    %1512 = vmatpush2.bf16.msra.mxu0 %v1083
    %1513 = vmatprep.subr.bf16.mxu0 %v1080
    %1514 = vmatpush2.bf16.msra.mxu0 %v1079
    %1515 = vmatprep.subr.bf16.mxu0 %v1076
    %1516 = vmatpush2.bf16.msra.mxu0 %v1075
    %1517 = vmatprep.subr.bf16.mxu0 %v1072
    %1518 = vmatpush2.bf16.msra.mxu0 %v1071
    %1519 = vmatprep.mubr.bf16.mxu0 %v354
    %1520 = vmatmul.mubr.bf16.gmra.mxu0 %v353
    %v1521 = vpop.f32.mrf.mxu0
    %v1522 = vadd.f32 %v325, %v1521
    %v1523 = vpop.f32.mrf.mxu0
    %v1524 = vadd.f32 %v329, %v1523
    %v1525 = vpop.f32.mrf.mxu0
    %v1526 = vpop.f32.mrf.mxu0
    %1527 = vdwg.mxu0
    %1528 = vmatprep.subr.bf16.mxu0 %v1132
    %1529 = vmatpush1.bf16.msra.mxu0 %v1131
    %1530 = vmatprep.subr.bf16.mxu0 %v1128
    %1531 = vmatpush1.bf16.msra.mxu0 %v1127
    %1532 = vmatprep.subr.bf16.mxu0 %v1124
    %1533 = vmatpush1.bf16.msra.mxu0 %v1123
    %1534 = vmatprep.subr.bf16.mxu0 %v1120
    %1535 = vmatpush1.bf16.msra.mxu0 %v1119
    %1536 = vmatprep.subr.bf16.mxu0 %v1116
    %1537 = vmatpush1.bf16.msra.mxu0 %v1115
    %1538 = vmatprep.subr.bf16.mxu0 %v1112
    %1539 = vmatpush1.bf16.msra.mxu0 %v1111
    %1540 = vmatprep.subr.bf16.mxu0 %v1108
    %1541 = vmatpush1.bf16.msra.mxu0 %v1107
    %1542 = vmatprep.subr.bf16.mxu0 %v1104
    %1543 = vmatpush1.bf16.msra.mxu0 %v1103
    %1544 = vmatprep.subr.bf16.mxu0 %v1164
    %1545 = vmatpush2.bf16.msra.mxu0 %v1163
    %1546 = vmatprep.subr.bf16.mxu0 %v1160
    %1547 = vmatpush2.bf16.msra.mxu0 %v1159
    %1548 = vmatprep.subr.bf16.mxu0 %v1156
    %1549 = vmatpush2.bf16.msra.mxu0 %v1155
    %1550 = vmatprep.subr.bf16.mxu0 %v1152
    %1551 = vmatpush2.bf16.msra.mxu0 %v1151
    %1552 = vmatprep.subr.bf16.mxu0 %v1148
    %1553 = vmatpush2.bf16.msra.mxu0 %v1147
    %1554 = vmatprep.subr.bf16.mxu0 %v1144
    %1555 = vmatpush2.bf16.msra.mxu0 %v1143
    %1556 = vmatprep.subr.bf16.mxu0 %v1140
    %1557 = vmatpush2.bf16.msra.mxu0 %v1139
    %1558 = vmatprep.subr.bf16.mxu0 %v1136
    %1559 = vmatpush2.bf16.msra.mxu0 %v1135
    %1560 = vmatprep.mubr.bf16.mxu0 %v356
    %1561 = vmatmul.mubr.bf16.gmra.mxu0 %v355
    %v1562 = vpop.f32.mrf.mxu0
    %v1563 = vadd.f32 %v1522, %v1562
    %v1564 = vpop.f32.mrf.mxu0
    %v1565 = vadd.f32 %v1524, %v1564
    %v1566 = vpop.f32.mrf.mxu0
    %v1567 = vpop.f32.mrf.mxu0
    %1568 = vdwg.mxu0
    %1569 = vmatprep.subr.bf16.mxu0 %v1196
    %1570 = vmatpush1.bf16.msra.mxu0 %v1195
    %1571 = vmatprep.subr.bf16.mxu0 %v1192
    %1572 = vmatpush1.bf16.msra.mxu0 %v1191
    %1573 = vmatprep.subr.bf16.mxu0 %v1188
    %1574 = vmatpush1.bf16.msra.mxu0 %v1187
    %1575 = vmatprep.subr.bf16.mxu0 %v1184
    %1576 = vmatpush1.bf16.msra.mxu0 %v1183
    %1577 = vmatprep.subr.bf16.mxu0 %v1180
    %1578 = vmatpush1.bf16.msra.mxu0 %v1179
    %1579 = vmatprep.subr.bf16.mxu0 %v1176
    %1580 = vmatpush1.bf16.msra.mxu0 %v1175
    %1581 = vmatprep.subr.bf16.mxu0 %v1172
    %1582 = vmatpush1.bf16.msra.mxu0 %v1171
    %1583 = vmatprep.subr.bf16.mxu0 %v1168
    %1584 = vmatpush1.bf16.msra.mxu0 %v1167
    %1585 = vmatprep.subr.bf16.mxu0 %v1228
    %1586 = vmatpush2.bf16.msra.mxu0 %v1227
    %1587 = vmatprep.subr.bf16.mxu0 %v1224
    %1588 = vmatpush2.bf16.msra.mxu0 %v1223
    %1589 = vmatprep.subr.bf16.mxu0 %v1220
    %1590 = vmatpush2.bf16.msra.mxu0 %v1219
    %1591 = vmatprep.subr.bf16.mxu0 %v1216
    %1592 = vmatpush2.bf16.msra.mxu0 %v1215
    %1593 = vmatprep.subr.bf16.mxu0 %v1212
    %1594 = vmatpush2.bf16.msra.mxu0 %v1211
    %1595 = vmatprep.subr.bf16.mxu0 %v1208
    %1596 = vmatpush2.bf16.msra.mxu0 %v1207
    %1597 = vmatprep.subr.bf16.mxu0 %v1204
    %1598 = vmatpush2.bf16.msra.mxu0 %v1203
    %1599 = vmatprep.subr.bf16.mxu0 %v1200
    %1600 = vmatpush2.bf16.msra.mxu0 %v1199
    %1601 = vmatprep.mubr.bf16.mxu0 %v358
    %1602 = vmatmul.mubr.bf16.gmra.mxu0 %v357
    %v1603 = vpop.f32.mrf.mxu0
    %v1604 = vadd.f32 %v1563, %v1603
    %v1605 = vpop.f32.mrf.mxu0
    %v1606 = vadd.f32 %v1565, %v1605
    %v1607 = vpop.f32.mrf.mxu0
    %v1608 = vpop.f32.mrf.mxu0
    %1609 = vdwg.mxu0
    %1610 = vmatprep.subr.bf16.mxu0 %v1260
    %1611 = vmatpush1.bf16.msra.mxu0 %v1259
    %1612 = vmatprep.subr.bf16.mxu0 %v1256
    %1613 = vmatpush1.bf16.msra.mxu0 %v1255
    %1614 = vmatprep.subr.bf16.mxu0 %v1252
    %1615 = vmatpush1.bf16.msra.mxu0 %v1251
    %1616 = vmatprep.subr.bf16.mxu0 %v1248
    %1617 = vmatpush1.bf16.msra.mxu0 %v1247
    %1618 = vmatprep.subr.bf16.mxu0 %v1244
    %1619 = vmatpush1.bf16.msra.mxu0 %v1243
    %1620 = vmatprep.subr.bf16.mxu0 %v1240
    %1621 = vmatpush1.bf16.msra.mxu0 %v1239
    %1622 = vmatprep.subr.bf16.mxu0 %v1236
    %1623 = vmatpush1.bf16.msra.mxu0 %v1235
    %1624 = vmatprep.subr.bf16.mxu0 %v1232
    %1625 = vmatpush1.bf16.msra.mxu0 %v1231
    %1626 = vmatprep.subr.bf16.mxu0 0
    %1627 = vmatpush2.bf16.msra.mxu0 0
    %1628 = vmatprep.subr.bf16.mxu0 0
    %1629 = vmatpush2.bf16.msra.mxu0 0
    %1630 = vmatprep.subr.bf16.mxu0 0
    %1631 = vmatpush2.bf16.msra.mxu0 0
    %1632 = vmatprep.subr.bf16.mxu0 0
    %1633 = vmatpush2.bf16.msra.mxu0 0
    %1634 = vmatprep.subr.bf16.mxu0 0
    %1635 = vmatpush2.bf16.msra.mxu0 0
    %1636 = vmatprep.subr.bf16.mxu0 0
    %1637 = vmatpush2.bf16.msra.mxu0 0
    %1638 = vmatprep.subr.bf16.mxu0 0
    %1639 = vmatpush2.bf16.msra.mxu0 0
    %1640 = vmatprep.subr.bf16.mxu0 0
    %1641 = vmatpush2.bf16.msra.mxu0 0
    %1642 = vmatprep.mubr.bf16.mxu0 0
    %1643 = vmatmul.mubr.bf16.gmra.mxu0 %v359
    %v1644 = vpop.f32.mrf.mxu0
    %v1645 = vadd.f32 %v1604, %v1644
    %v1646 = vpop.f32.mrf.mxu0
    %v1647 = vadd.f32 %v1606, %v1646
    %v1648 = vpop.f32.mrf.mxu0
    %v1649 = vpop.f32.mrf.mxu0
    %1650 = vdwg.mxu0
    %1651 = vmatprep.subr.bf16.mxu0 %v1070
    %1652 = vmatpush1.bf16.msra.mxu0 %v1069
    %1653 = vmatprep.subr.bf16.mxu0 %v1066
    %1654 = vmatpush1.bf16.msra.mxu0 %v1065
    %1655 = vmatprep.subr.bf16.mxu0 %v1062
    %1656 = vmatpush1.bf16.msra.mxu0 %v1061
    %1657 = vmatprep.subr.bf16.mxu0 %v1058
    %1658 = vmatpush1.bf16.msra.mxu0 %v1057
    %1659 = vmatprep.subr.bf16.mxu0 %v1054
    %1660 = vmatpush1.bf16.msra.mxu0 %v1053
    %1661 = vmatprep.subr.bf16.mxu0 %v1050
    %1662 = vmatpush1.bf16.msra.mxu0 %v1049
    %1663 = vmatprep.subr.bf16.mxu0 %v1046
    %1664 = vmatpush1.bf16.msra.mxu0 %v1045
    %1665 = vmatprep.subr.bf16.mxu0 %v1042
    %1666 = vmatpush1.bf16.msra.mxu0 %v1041
    %1667 = vmatprep.subr.bf16.mxu0 %v1102
    %1668 = vmatpush2.bf16.msra.mxu0 %v1101
    %1669 = vmatprep.subr.bf16.mxu0 %v1098
    %1670 = vmatpush2.bf16.msra.mxu0 %v1097
    %1671 = vmatprep.subr.bf16.mxu0 %v1094
    %1672 = vmatpush2.bf16.msra.mxu0 %v1093
    %1673 = vmatprep.subr.bf16.mxu0 %v1090
    %1674 = vmatpush2.bf16.msra.mxu0 %v1089
    %1675 = vmatprep.subr.bf16.mxu0 %v1086
    %1676 = vmatpush2.bf16.msra.mxu0 %v1085
    %1677 = vmatprep.subr.bf16.mxu0 %v1082
    %1678 = vmatpush2.bf16.msra.mxu0 %v1081
    %1679 = vmatprep.subr.bf16.mxu0 %v1078
    %1680 = vmatpush2.bf16.msra.mxu0 %v1077
    %1681 = vmatprep.subr.bf16.mxu0 %v1074
    %1682 = vmatpush2.bf16.msra.mxu0 %v1073
    %1683 = vmatprep.mubr.bf16.mxu0 %v354
    %1684 = vmatmul.mubr.bf16.gmra.mxu0 %v353
    %v1685 = vpop.f32.mrf.mxu0
    %v1686 = vadd.f32 %v333, %v1685
    %v1687 = vpop.f32.mrf.mxu0
    %v1688 = vadd.f32 %v337, %v1687
    %v1689 = vpop.f32.mrf.mxu0
    %v1690 = vpop.f32.mrf.mxu0
    %1691 = vdwg.mxu0
    %1692 = vmatprep.subr.bf16.mxu0 %v1134
    %1693 = vmatpush1.bf16.msra.mxu0 %v1133
    %1694 = vmatprep.subr.bf16.mxu0 %v1130
    %1695 = vmatpush1.bf16.msra.mxu0 %v1129
    %1696 = vmatprep.subr.bf16.mxu0 %v1126
    %1697 = vmatpush1.bf16.msra.mxu0 %v1125
    %1698 = vmatprep.subr.bf16.mxu0 %v1122
    %1699 = vmatpush1.bf16.msra.mxu0 %v1121
    %1700 = vmatprep.subr.bf16.mxu0 %v1118
    %1701 = vmatpush1.bf16.msra.mxu0 %v1117
    %1702 = vmatprep.subr.bf16.mxu0 %v1114
    %1703 = vmatpush1.bf16.msra.mxu0 %v1113
    %1704 = vmatprep.subr.bf16.mxu0 %v1110
    %1705 = vmatpush1.bf16.msra.mxu0 %v1109
    %1706 = vmatprep.subr.bf16.mxu0 %v1106
    %1707 = vmatpush1.bf16.msra.mxu0 %v1105
    %1708 = vmatprep.subr.bf16.mxu0 %v1166
    %1709 = vmatpush2.bf16.msra.mxu0 %v1165
    %1710 = vmatprep.subr.bf16.mxu0 %v1162
    %1711 = vmatpush2.bf16.msra.mxu0 %v1161
    %1712 = vmatprep.subr.bf16.mxu0 %v1158
    %1713 = vmatpush2.bf16.msra.mxu0 %v1157
    %1714 = vmatprep.subr.bf16.mxu0 %v1154
    %1715 = vmatpush2.bf16.msra.mxu0 %v1153
    %1716 = vmatprep.subr.bf16.mxu0 %v1150
    %1717 = vmatpush2.bf16.msra.mxu0 %v1149
    %1718 = vmatprep.subr.bf16.mxu0 %v1146
    %1719 = vmatpush2.bf16.msra.mxu0 %v1145
    %1720 = vmatprep.subr.bf16.mxu0 %v1142
    %1721 = vmatpush2.bf16.msra.mxu0 %v1141
    %1722 = vmatprep.subr.bf16.mxu0 %v1138
    %1723 = vmatpush2.bf16.msra.mxu0 %v1137
    %1724 = vmatprep.mubr.bf16.mxu0 %v356
    %1725 = vmatmul.mubr.bf16.gmra.mxu0 %v355
    %v1726 = vpop.f32.mrf.mxu0
    %v1727 = vadd.f32 %v1686, %v1726
    %v1728 = vpop.f32.mrf.mxu0
    %v1729 = vadd.f32 %v1688, %v1728
    %v1730 = vpop.f32.mrf.mxu0
    %v1731 = vpop.f32.mrf.mxu0
    %1732 = vdwg.mxu0
    %1733 = vmatprep.subr.bf16.mxu0 %v1198
    %1734 = vmatpush1.bf16.msra.mxu0 %v1197
    %1735 = vmatprep.subr.bf16.mxu0 %v1194
    %1736 = vmatpush1.bf16.msra.mxu0 %v1193
    %1737 = vmatprep.subr.bf16.mxu0 %v1190
    %1738 = vmatpush1.bf16.msra.mxu0 %v1189
    %1739 = vmatprep.subr.bf16.mxu0 %v1186
    %1740 = vmatpush1.bf16.msra.mxu0 %v1185
    %1741 = vmatprep.subr.bf16.mxu0 %v1182
    %1742 = vmatpush1.bf16.msra.mxu0 %v1181
    %1743 = vmatprep.subr.bf16.mxu0 %v1178
    %1744 = vmatpush1.bf16.msra.mxu0 %v1177
    %1745 = vmatprep.subr.bf16.mxu0 %v1174
    %1746 = vmatpush1.bf16.msra.mxu0 %v1173
    %1747 = vmatprep.subr.bf16.mxu0 %v1170
    %1748 = vmatpush1.bf16.msra.mxu0 %v1169
    %1749 = vmatprep.subr.bf16.mxu0 %v1230
    %1750 = vmatpush2.bf16.msra.mxu0 %v1229
    %1751 = vmatprep.subr.bf16.mxu0 %v1226
    %1752 = vmatpush2.bf16.msra.mxu0 %v1225
    %1753 = vmatprep.subr.bf16.mxu0 %v1222
    %1754 = vmatpush2.bf16.msra.mxu0 %v1221
    %1755 = vmatprep.subr.bf16.mxu0 %v1218
    %1756 = vmatpush2.bf16.msra.mxu0 %v1217
    %1757 = vmatprep.subr.bf16.mxu0 %v1214
    %1758 = vmatpush2.bf16.msra.mxu0 %v1213
    %1759 = vmatprep.subr.bf16.mxu0 %v1210
    %1760 = vmatpush2.bf16.msra.mxu0 %v1209
    %1761 = vmatprep.subr.bf16.mxu0 %v1206
    %1762 = vmatpush2.bf16.msra.mxu0 %v1205
    %1763 = vmatprep.subr.bf16.mxu0 %v1202
    %1764 = vmatpush2.bf16.msra.mxu0 %v1201
    %1765 = vmatprep.mubr.bf16.mxu0 %v358
    %1766 = vmatmul.mubr.bf16.gmra.mxu0 %v357
    %v1767 = vpop.f32.mrf.mxu0
    %v1768 = vadd.f32 %v1727, %v1767
    %v1769 = vpop.f32.mrf.mxu0
    %v1770 = vadd.f32 %v1729, %v1769
    %v1771 = vpop.f32.mrf.mxu0
    %v1772 = vpop.f32.mrf.mxu0
    %1773 = vdwg.mxu0
    %1774 = vmatprep.subr.bf16.mxu0 %v1262
    %1775 = vmatpush1.bf16.msra.mxu0 %v1261
    %1776 = vmatprep.subr.bf16.mxu0 %v1258
    %1777 = vmatpush1.bf16.msra.mxu0 %v1257
    %1778 = vmatprep.subr.bf16.mxu0 %v1254
    %1779 = vmatpush1.bf16.msra.mxu0 %v1253
    %1780 = vmatprep.subr.bf16.mxu0 %v1250
    %1781 = vmatpush1.bf16.msra.mxu0 %v1249
    %1782 = vmatprep.subr.bf16.mxu0 %v1246
    %1783 = vmatpush1.bf16.msra.mxu0 %v1245
    %1784 = vmatprep.subr.bf16.mxu0 %v1242
    %1785 = vmatpush1.bf16.msra.mxu0 %v1241
    %1786 = vmatprep.subr.bf16.mxu0 %v1238
    %1787 = vmatpush1.bf16.msra.mxu0 %v1237
    %1788 = vmatprep.subr.bf16.mxu0 %v1234
    %1789 = vmatpush1.bf16.msra.mxu0 %v1233
    %1790 = vmatprep.subr.bf16.mxu0 0
    %1791 = vmatpush2.bf16.msra.mxu0 0
    %1792 = vmatprep.subr.bf16.mxu0 0
    %1793 = vmatpush2.bf16.msra.mxu0 0
    %1794 = vmatprep.subr.bf16.mxu0 0
    %1795 = vmatpush2.bf16.msra.mxu0 0
    %1796 = vmatprep.subr.bf16.mxu0 0
    %1797 = vmatpush2.bf16.msra.mxu0 0
    %1798 = vmatprep.subr.bf16.mxu0 0
    %1799 = vmatpush2.bf16.msra.mxu0 0
    %1800 = vmatprep.subr.bf16.mxu0 0
    %1801 = vmatpush2.bf16.msra.mxu0 0
    %1802 = vmatprep.subr.bf16.mxu0 0
    %1803 = vmatpush2.bf16.msra.mxu0 0
    %1804 = vmatprep.subr.bf16.mxu0 0
    %1805 = vmatpush2.bf16.msra.mxu0 0
    %1806 = vmatprep.mubr.bf16.mxu0 0
    %1807 = vmatmul.mubr.bf16.gmra.mxu0 %v359
    %v1808 = vpop.f32.mrf.mxu0
    %v1809 = vadd.f32 %v1768, %v1808
    %v1810 = vpop.f32.mrf.mxu0
    %v1811 = vadd.f32 %v1770, %v1810
    %v1812 = vpop.f32.mrf.mxu0
    %v1813 = vpop.f32.mrf.mxu0
    %1814 = vdwg.mxu0
    %v1815 = vmax.f32 %v1645, 0.0
    %v1816 = vmax.f32 %v1647, 0.0
    %v1817 = vmax.f32 %v1809, 0.0
    %v1818 = vmax.f32 %v1811, 0.0
    %v1819 = vpack.c.bf16 %v1815, %v1815
    %v1820 = vpack.c.bf16 %v1816, %v1816
    %v1821 = vpack.c.bf16 %v1817, %v1817
    %v1822 = vpack.c.bf16 %v1818, %v1818
    %v1823 = vld [vmem:[#allocation8] sm:$0xff]
    %v1824 = vld [vmem:[#allocation8 + $0x8] sm:$0xff]
    %v1825 = vld [vmem:[#allocation8 + $0x10] sm:$0xff]
    %v1826 = vld [vmem:[#allocation8 + $0x18] sm:$0xff]
    %v1827 = vld [vmem:[#allocation8 + $0x20] sm:$0xff]
    %v1828 = vld [vmem:[#allocation8 + $0x28] sm:$0xff]
    %v1829 = vld [vmem:[#allocation8 + $0x30] sm:$0xff]
    %v1830 = vld [vmem:[#allocation8 + $0x38] sm:$0xff]
    %v1831 = vld [vmem:[#allocation8 + $0x40] sm:$0xff]
    %v1832 = vld [vmem:[#allocation8 + $0x48] sm:$0xff]
    %v1833 = vld [vmem:[#allocation8 + $0x50] sm:$0xff]
    %v1834 = vld [vmem:[#allocation8 + $0x58] sm:$0xff]
    %v1835 = vld [vmem:[#allocation8 + $0x60] sm:$0xff]
    %v1836 = vld [vmem:[#allocation8 + $0x68] sm:$0xff]
    %v1837 = vld [vmem:[#allocation8 + $0x70] sm:$0xff]
    %v1838 = vld [vmem:[#allocation8 + $0x78] sm:$0xff]
    %v1839 = vld [vmem:[#allocation8 + $0x80] sm:$0xff]
    %v1840 = vld [vmem:[#allocation8 + $0x88] sm:$0xff]
    %v1841 = vld [vmem:[#allocation8 + $0x90] sm:$0xff]
    %v1842 = vld [vmem:[#allocation8 + $0x98] sm:$0xff]
    %v1843 = vld [vmem:[#allocation8 + $0xa0] sm:$0xff]
    %v1844 = vld [vmem:[#allocation8 + $0xa8] sm:$0xff]
    %v1845 = vld [vmem:[#allocation8 + $0xb0] sm:$0xff]
    %v1846 = vld [vmem:[#allocation8 + $0xb8] sm:$0xff]
    %v1847 = vld [vmem:[#allocation8 + $0xc0] sm:$0xff]
    %v1848 = vld [vmem:[#allocation8 + $0xc8] sm:$0xff]
    %v1849 = vld [vmem:[#allocation8 + $0xd0] sm:$0xff]
    %v1850 = vld [vmem:[#allocation8 + $0xd8] sm:$0xff]
    %v1851 = vld [vmem:[#allocation8 + $0xe0] sm:$0xff]
    %v1852 = vld [vmem:[#allocation8 + $0xe8] sm:$0xff]
    %v1853 = vld [vmem:[#allocation8 + $0xf0] sm:$0xff]
    %v1854 = vld [vmem:[#allocation8 + $0xf8] sm:$0xff]
    %v1855 = vld [vmem:[#allocation8 + $0x100] sm:$0xff]
    %v1856 = vld [vmem:[#allocation8 + $0x108] sm:$0xff]
    %v1857 = vld [vmem:[#allocation8 + $0x110] sm:$0xff]
    %v1858 = vld [vmem:[#allocation8 + $0x118] sm:$0xff]
    %v1859 = vld [vmem:[#allocation8 + $0x120] sm:$0xff]
    %v1860 = vld [vmem:[#allocation8 + $0x128] sm:$0xff]
    %v1861 = vld [vmem:[#allocation8 + $0x130] sm:$0xff]
    %v1862 = vld [vmem:[#allocation8 + $0x138] sm:$0xff]
    %v1863 = vld [vmem:[#allocation8 + $0x140] sm:$0xff]
    %v1864 = vld [vmem:[#allocation8 + $0x148] sm:$0xff]
    %v1865 = vld [vmem:[#allocation8 + $0x150] sm:$0xff]
    %v1866 = vld [vmem:[#allocation8 + $0x158] sm:$0xff]
    %v1867 = vld [vmem:[#allocation8 + $0x160] sm:$0xff]
    %v1868 = vld [vmem:[#allocation8 + $0x168] sm:$0xff]
    %v1869 = vld [vmem:[#allocation8 + $0x170] sm:$0xff]
    %v1870 = vld [vmem:[#allocation8 + $0x178] sm:$0xff]
    %v1871 = vld [vmem:[#allocation8 + $0x180] sm:$0xff]
    %v1872 = vld [vmem:[#allocation8 + $0x188] sm:$0xff]
    %v1873 = vld [vmem:[#allocation8 + $0x190] sm:$0xff]
    %v1874 = vld [vmem:[#allocation8 + $0x198] sm:$0xff]
    %v1875 = vld [vmem:[#allocation8 + $0x1a0] sm:$0xff]
    %v1876 = vld [vmem:[#allocation8 + $0x1a8] sm:$0xff]
    %v1877 = vld [vmem:[#allocation8 + $0x1b0] sm:$0xff]
    %v1878 = vld [vmem:[#allocation8 + $0x1b8] sm:$0xff]
    %v1879 = vld [vmem:[#allocation8 + $0x1c0] sm:$0xff]
    %v1880 = vld [vmem:[#allocation8 + $0x1c8] sm:$0xff]
    %v1881 = vld [vmem:[#allocation8 + $0x1d0] sm:$0xff]
    %v1882 = vld [vmem:[#allocation8 + $0x1d8] sm:$0xff]
    %v1883 = vld [vmem:[#allocation8 + $0x1e0] sm:$0xff]
    %v1884 = vld [vmem:[#allocation8 + $0x1e8] sm:$0xff]
    %v1885 = vld [vmem:[#allocation8 + $0x1f0] sm:$0xff]
    %v1886 = vld [vmem:[#allocation8 + $0x1f8] sm:$0xff]
    %v1887 = vld [vmem:[#allocation8 + $0x200] sm:$0xff]
    %v1888 = vld [vmem:[#allocation8 + $0x208] sm:$0xff]
    %v1889 = vld [vmem:[#allocation8 + $0x210] sm:$0xff]
    %v1890 = vld [vmem:[#allocation8 + $0x218] sm:$0xff]
    %v1891 = vld [vmem:[#allocation8 + $0x220] sm:$0xff]
    %v1892 = vld [vmem:[#allocation8 + $0x228] sm:$0xff]
    %v1893 = vld [vmem:[#allocation8 + $0x230] sm:$0xff]
    %v1894 = vld [vmem:[#allocation8 + $0x238] sm:$0xff]
    %v1895 = vld [vmem:[#allocation8 + $0x240] sm:$0xff]
    %v1896 = vld [vmem:[#allocation8 + $0x248] sm:$0xff]
    %v1897 = vld [vmem:[#allocation8 + $0x250] sm:$0xff]
    %v1898 = vld [vmem:[#allocation8 + $0x258] sm:$0xff]
    %v1899 = vld [vmem:[#allocation8 + $0x260] sm:$0xff]
    %v1900 = vld [vmem:[#allocation8 + $0x268] sm:$0xff]
    %v1901 = vld [vmem:[#allocation8 + $0x270] sm:$0xff]
    %v1902 = vld [vmem:[#allocation8 + $0x278] sm:$0xff]
    %v1903 = vld [vmem:[#allocation8 + $0x280] sm:$0xff]
    %v1904 = vld [vmem:[#allocation8 + $0x288] sm:$0xff]
    %v1905 = vld [vmem:[#allocation8 + $0x290] sm:$0xff]
    %v1906 = vld [vmem:[#allocation8 + $0x298] sm:$0xff]
    %v1907 = vld [vmem:[#allocation8 + $0x2a0] sm:$0xff]
    %v1908 = vld [vmem:[#allocation8 + $0x2a8] sm:$0xff]
    %v1909 = vld [vmem:[#allocation8 + $0x2b0] sm:$0xff]
    %v1910 = vld [vmem:[#allocation8 + $0x2b8] sm:$0xff]
    %v1911 = vld [vmem:[#allocation8 + $0x2c0] sm:$0xff]
    %v1912 = vld [vmem:[#allocation8 + $0x2c8] sm:$0xff]
    %v1913 = vld [vmem:[#allocation8 + $0x2d0] sm:$0xff]
    %v1914 = vld [vmem:[#allocation8 + $0x2d8] sm:$0xff]
    %v1915 = vld [vmem:[#allocation8 + $0x2e0] sm:$0xff]
    %v1916 = vld [vmem:[#allocation8 + $0x2e8] sm:$0xff]
    %v1917 = vld [vmem:[#allocation8 + $0x2f0] sm:$0xff]
    %v1918 = vld [vmem:[#allocation8 + $0x2f8] sm:$0xff]
    %v1919 = vld [vmem:[#allocation8 + $0x300] sm:$0xff]
    %v1920 = vld [vmem:[#allocation8 + $0x308] sm:$0xff]
    %v1921 = vld [vmem:[#allocation8 + $0x310] sm:$0xff]
    %v1922 = vld [vmem:[#allocation8 + $0x318] sm:$0xff]
    %v1923 = vld [vmem:[#allocation8 + $0x320] sm:$0xff]
    %v1924 = vld [vmem:[#allocation8 + $0x328] sm:$0xff]
    %v1925 = vld [vmem:[#allocation8 + $0x330] sm:$0xff]
    %v1926 = vld [vmem:[#allocation8 + $0x338] sm:$0xff]
    %v1927 = vld [vmem:[#allocation8 + $0x340] sm:$0xff]
    %v1928 = vld [vmem:[#allocation8 + $0x348] sm:$0xff]
    %v1929 = vld [vmem:[#allocation8 + $0x350] sm:$0xff]
    %v1930 = vld [vmem:[#allocation8 + $0x358] sm:$0xff]
    %v1931 = vld [vmem:[#allocation8 + $0x360] sm:$0xff]
    %v1932 = vld [vmem:[#allocation8 + $0x368] sm:$0xff]
    %v1933 = vld [vmem:[#allocation8 + $0x370] sm:$0xff]
    %v1934 = vld [vmem:[#allocation8 + $0x378] sm:$0xff]
    %v1935 = vld [vmem:[#allocation8 + $0x380] sm:$0xff]
    %v1936 = vld [vmem:[#allocation8 + $0x388] sm:$0xff]
    %v1937 = vld [vmem:[#allocation8 + $0x390] sm:$0xff]
    %v1938 = vld [vmem:[#allocation8 + $0x398] sm:$0xff]
    %v1939 = vld [vmem:[#allocation8 + $0x3a0] sm:$0xff]
    %v1940 = vld [vmem:[#allocation8 + $0x3a8] sm:$0xff]
    %v1941 = vld [vmem:[#allocation8 + $0x3b0] sm:$0xff]
    %v1942 = vld [vmem:[#allocation8 + $0x3b8] sm:$0xff]
    %v1943 = vld [vmem:[#allocation8 + $0x3c0] sm:$0xff]
    %v1944 = vld [vmem:[#allocation8 + $0x3c8] sm:$0xff]
    %v1945 = vld [vmem:[#allocation8 + $0x3d0] sm:$0xff]
    %v1946 = vld [vmem:[#allocation8 + $0x3d8] sm:$0xff]
    %v1947 = vld [vmem:[#allocation8 + $0x3e0] sm:$0xff]
    %v1948 = vld [vmem:[#allocation8 + $0x3e8] sm:$0xff]
    %v1949 = vld [vmem:[#allocation8 + $0x3f0] sm:$0xff]
    %v1950 = vld [vmem:[#allocation8 + $0x3f8] sm:$0xff]
    %v1951 = vld [vmem:[%s4] sm:$0xf]
    %v1953 = vlaneseq
    %v1954 = vshrl.u32 %v1953, 7
    %v1955 = vsub.s32 0, %v1954
    %v1956 = vrot.slane %v1951, %v1955
    %v1957 = vlaneseq
    %v1958 = vshrl.u32 %v1957, 7
    %v1959 = vsub.s32 1, %v1958
    %v1960 = vrot.slane %v1951, %v1959
    %v1961 = vlaneseq
    %v1962 = vshrl.u32 %v1961, 7
    %v1963 = vsub.s32 2, %v1962
    %v1964 = vrot.slane %v1951, %v1963
    %v1965 = vlaneseq
    %v1966 = vshrl.u32 %v1965, 7
    %v1967 = vsub.s32 3, %v1966
    %v1968 = vrot.slane %v1951, %v1967
    %v2101 = vunpack.c.l.b16 %v1823
    %v2102 = vunpack.c.h.b16 %v1823
    %v2103 = vunpack.c.l.b16 %v1824
    %v2104 = vunpack.c.h.b16 %v1824
    %v2105 = vunpack.c.l.b16 %v1825
    %v2106 = vunpack.c.h.b16 %v1825
    %v2107 = vunpack.c.l.b16 %v1826
    %v2108 = vunpack.c.h.b16 %v1826
    %v2109 = vunpack.c.l.b16 %v1827
    %v2110 = vunpack.c.h.b16 %v1827
    %v2111 = vunpack.c.l.b16 %v1828
    %v2112 = vunpack.c.h.b16 %v1828
    %v2113 = vunpack.c.l.b16 %v1829
    %v2114 = vunpack.c.h.b16 %v1829
    %v2115 = vunpack.c.l.b16 %v1830
    %v2116 = vunpack.c.h.b16 %v1830
    %v2117 = vunpack.c.l.b16 %v1831
    %v2118 = vunpack.c.h.b16 %v1831
    %v2119 = vunpack.c.l.b16 %v1832
    %v2120 = vunpack.c.h.b16 %v1832
    %v2121 = vunpack.c.l.b16 %v1833
    %v2122 = vunpack.c.h.b16 %v1833
    %v2123 = vunpack.c.l.b16 %v1834
    %v2124 = vunpack.c.h.b16 %v1834
    %v2125 = vunpack.c.l.b16 %v1835
    %v2126 = vunpack.c.h.b16 %v1835
    %v2127 = vunpack.c.l.b16 %v1836
    %v2128 = vunpack.c.h.b16 %v1836
    %v2129 = vunpack.c.l.b16 %v1837
    %v2130 = vunpack.c.h.b16 %v1837
    %v2131 = vunpack.c.l.b16 %v1838
    %v2132 = vunpack.c.h.b16 %v1838
    %v2133 = vunpack.c.l.b16 %v1839
    %v2134 = vunpack.c.h.b16 %v1839
    %v2135 = vunpack.c.l.b16 %v1840
    %v2136 = vunpack.c.h.b16 %v1840
    %v2137 = vunpack.c.l.b16 %v1841
    %v2138 = vunpack.c.h.b16 %v1841
    %v2139 = vunpack.c.l.b16 %v1842
    %v2140 = vunpack.c.h.b16 %v1842
    %v2141 = vunpack.c.l.b16 %v1843
    %v2142 = vunpack.c.h.b16 %v1843
    %v2143 = vunpack.c.l.b16 %v1844
    %v2144 = vunpack.c.h.b16 %v1844
    %v2145 = vunpack.c.l.b16 %v1845
    %v2146 = vunpack.c.h.b16 %v1845
    %v2147 = vunpack.c.l.b16 %v1846
    %v2148 = vunpack.c.h.b16 %v1846
    %v2149 = vunpack.c.l.b16 %v1847
    %v2150 = vunpack.c.h.b16 %v1847
    %v2151 = vunpack.c.l.b16 %v1848
    %v2152 = vunpack.c.h.b16 %v1848
    %v2153 = vunpack.c.l.b16 %v1849
    %v2154 = vunpack.c.h.b16 %v1849
    %v2155 = vunpack.c.l.b16 %v1850
    %v2156 = vunpack.c.h.b16 %v1850
    %v2157 = vunpack.c.l.b16 %v1851
    %v2158 = vunpack.c.h.b16 %v1851
    %v2159 = vunpack.c.l.b16 %v1852
    %v2160 = vunpack.c.h.b16 %v1852
    %v2161 = vunpack.c.l.b16 %v1853
    %v2162 = vunpack.c.h.b16 %v1853
    %v2163 = vunpack.c.l.b16 %v1854
    %v2164 = vunpack.c.h.b16 %v1854
    %v2165 = vunpack.c.l.b16 %v1855
    %v2166 = vunpack.c.h.b16 %v1855
    %v2167 = vunpack.c.l.b16 %v1856
    %v2168 = vunpack.c.h.b16 %v1856
    %v2169 = vunpack.c.l.b16 %v1857
    %v2170 = vunpack.c.h.b16 %v1857
    %v2171 = vunpack.c.l.b16 %v1858
    %v2172 = vunpack.c.h.b16 %v1858
    %v2173 = vunpack.c.l.b16 %v1859
    %v2174 = vunpack.c.h.b16 %v1859
    %v2175 = vunpack.c.l.b16 %v1860
    %v2176 = vunpack.c.h.b16 %v1860
    %v2177 = vunpack.c.l.b16 %v1861
    %v2178 = vunpack.c.h.b16 %v1861
    %v2179 = vunpack.c.l.b16 %v1862
    %v2180 = vunpack.c.h.b16 %v1862
    %v2181 = vunpack.c.l.b16 %v1863
    %v2182 = vunpack.c.h.b16 %v1863
    %v2183 = vunpack.c.l.b16 %v1864
    %v2184 = vunpack.c.h.b16 %v1864
    %v2185 = vunpack.c.l.b16 %v1865
    %v2186 = vunpack.c.h.b16 %v1865
    %v2187 = vunpack.c.l.b16 %v1866
    %v2188 = vunpack.c.h.b16 %v1866
    %v2189 = vunpack.c.l.b16 %v1867
    %v2190 = vunpack.c.h.b16 %v1867
    %v2191 = vunpack.c.l.b16 %v1868
    %v2192 = vunpack.c.h.b16 %v1868
    %v2193 = vunpack.c.l.b16 %v1869
    %v2194 = vunpack.c.h.b16 %v1869
    %v2195 = vunpack.c.l.b16 %v1870
    %v2196 = vunpack.c.h.b16 %v1870
    %v2197 = vunpack.c.l.b16 %v1871
    %v2198 = vunpack.c.h.b16 %v1871
    %v2199 = vunpack.c.l.b16 %v1872
    %v2200 = vunpack.c.h.b16 %v1872
    %v2201 = vunpack.c.l.b16 %v1873
    %v2202 = vunpack.c.h.b16 %v1873
    %v2203 = vunpack.c.l.b16 %v1874
    %v2204 = vunpack.c.h.b16 %v1874
    %v2205 = vunpack.c.l.b16 %v1875
    %v2206 = vunpack.c.h.b16 %v1875
    %v2207 = vunpack.c.l.b16 %v1876
    %v2208 = vunpack.c.h.b16 %v1876
    %v2209 = vunpack.c.l.b16 %v1877
    %v2210 = vunpack.c.h.b16 %v1877
    %v2211 = vunpack.c.l.b16 %v1878
    %v2212 = vunpack.c.h.b16 %v1878
    %v2213 = vunpack.c.l.b16 %v1879
    %v2214 = vunpack.c.h.b16 %v1879
    %v2215 = vunpack.c.l.b16 %v1880
    %v2216 = vunpack.c.h.b16 %v1880
    %v2217 = vunpack.c.l.b16 %v1881
    %v2218 = vunpack.c.h.b16 %v1881
    %v2219 = vunpack.c.l.b16 %v1882
    %v2220 = vunpack.c.h.b16 %v1882
    %v2221 = vunpack.c.l.b16 %v1883
    %v2222 = vunpack.c.h.b16 %v1883
    %v2223 = vunpack.c.l.b16 %v1884
    %v2224 = vunpack.c.h.b16 %v1884
    %v2225 = vunpack.c.l.b16 %v1885
    %v2226 = vunpack.c.h.b16 %v1885
    %v2227 = vunpack.c.l.b16 %v1886
    %v2228 = vunpack.c.h.b16 %v1886
    %v2229 = vunpack.c.l.b16 %v1887
    %v2230 = vunpack.c.h.b16 %v1887
    %v2231 = vunpack.c.l.b16 %v1888
    %v2232 = vunpack.c.h.b16 %v1888
    %v2233 = vunpack.c.l.b16 %v1889
    %v2234 = vunpack.c.h.b16 %v1889
    %v2235 = vunpack.c.l.b16 %v1890
    %v2236 = vunpack.c.h.b16 %v1890
    %v2237 = vunpack.c.l.b16 %v1891
    %v2238 = vunpack.c.h.b16 %v1891
    %v2239 = vunpack.c.l.b16 %v1892
    %v2240 = vunpack.c.h.b16 %v1892
    %v2241 = vunpack.c.l.b16 %v1893
    %v2242 = vunpack.c.h.b16 %v1893
    %v2243 = vunpack.c.l.b16 %v1894
    %v2244 = vunpack.c.h.b16 %v1894
    %v2245 = vunpack.c.l.b16 %v1895
    %v2246 = vunpack.c.h.b16 %v1895
    %v2247 = vunpack.c.l.b16 %v1896
    %v2248 = vunpack.c.h.b16 %v1896
    %v2249 = vunpack.c.l.b16 %v1897
    %v2250 = vunpack.c.h.b16 %v1897
    %v2251 = vunpack.c.l.b16 %v1898
    %v2252 = vunpack.c.h.b16 %v1898
    %v2253 = vunpack.c.l.b16 %v1899
    %v2254 = vunpack.c.h.b16 %v1899
    %v2255 = vunpack.c.l.b16 %v1900
    %v2256 = vunpack.c.h.b16 %v1900
    %v2257 = vunpack.c.l.b16 %v1901
    %v2258 = vunpack.c.h.b16 %v1901
    %v2259 = vunpack.c.l.b16 %v1902
    %v2260 = vunpack.c.h.b16 %v1902
    %v2261 = vunpack.c.l.b16 %v1903
    %v2262 = vunpack.c.h.b16 %v1903
    %v2263 = vunpack.c.l.b16 %v1904
    %v2264 = vunpack.c.h.b16 %v1904
    %v2265 = vunpack.c.l.b16 %v1905
    %v2266 = vunpack.c.h.b16 %v1905
    %v2267 = vunpack.c.l.b16 %v1906
    %v2268 = vunpack.c.h.b16 %v1906
    %v2269 = vunpack.c.l.b16 %v1907
    %v2270 = vunpack.c.h.b16 %v1907
    %v2271 = vunpack.c.l.b16 %v1908
    %v2272 = vunpack.c.h.b16 %v1908
    %v2273 = vunpack.c.l.b16 %v1909
    %v2274 = vunpack.c.h.b16 %v1909
    %v2275 = vunpack.c.l.b16 %v1910
    %v2276 = vunpack.c.h.b16 %v1910
    %v2277 = vunpack.c.l.b16 %v1911
    %v2278 = vunpack.c.h.b16 %v1911
    %v2279 = vunpack.c.l.b16 %v1912
    %v2280 = vunpack.c.h.b16 %v1912
    %v2281 = vunpack.c.l.b16 %v1913
    %v2282 = vunpack.c.h.b16 %v1913
    %v2283 = vunpack.c.l.b16 %v1914
    %v2284 = vunpack.c.h.b16 %v1914
    %v2285 = vunpack.c.l.b16 %v1915
    %v2286 = vunpack.c.h.b16 %v1915
    %v2287 = vunpack.c.l.b16 %v1916
    %v2288 = vunpack.c.h.b16 %v1916
    %v2289 = vunpack.c.l.b16 %v1917
    %v2290 = vunpack.c.h.b16 %v1917
    %v2291 = vunpack.c.l.b16 %v1918
    %v2292 = vunpack.c.h.b16 %v1918
    %v2293 = vunpack.c.l.b16 %v1919
    %v2294 = vunpack.c.h.b16 %v1919
    %v2295 = vunpack.c.l.b16 %v1920
    %v2296 = vunpack.c.h.b16 %v1920
    %v2297 = vunpack.c.l.b16 %v1921
    %v2298 = vunpack.c.h.b16 %v1921
    %v2299 = vunpack.c.l.b16 %v1922
    %v2300 = vunpack.c.h.b16 %v1922
    %v2301 = vunpack.c.l.b16 %v1923
    %v2302 = vunpack.c.h.b16 %v1923
    %v2303 = vunpack.c.l.b16 %v1924
    %v2304 = vunpack.c.h.b16 %v1924
    %v2305 = vunpack.c.l.b16 %v1925
    %v2306 = vunpack.c.h.b16 %v1925
    %v2307 = vunpack.c.l.b16 %v1926
    %v2308 = vunpack.c.h.b16 %v1926
    %v2309 = vunpack.c.l.b16 %v1927
    %v2310 = vunpack.c.h.b16 %v1927
    %v2311 = vunpack.c.l.b16 %v1928
    %v2312 = vunpack.c.h.b16 %v1928
    %v2313 = vunpack.c.l.b16 %v1929
    %v2314 = vunpack.c.h.b16 %v1929
    %v2315 = vunpack.c.l.b16 %v1930
    %v2316 = vunpack.c.h.b16 %v1930
    %v2317 = vunpack.c.l.b16 %v1931
    %v2318 = vunpack.c.h.b16 %v1931
    %v2319 = vunpack.c.l.b16 %v1932
    %v2320 = vunpack.c.h.b16 %v1932
    %v2321 = vunpack.c.l.b16 %v1933
    %v2322 = vunpack.c.h.b16 %v1933
    %v2323 = vunpack.c.l.b16 %v1934
    %v2324 = vunpack.c.h.b16 %v1934
    %v2325 = vunpack.c.l.b16 %v1935
    %v2326 = vunpack.c.h.b16 %v1935
    %v2327 = vunpack.c.l.b16 %v1936
    %v2328 = vunpack.c.h.b16 %v1936
    %v2329 = vunpack.c.l.b16 %v1937
    %v2330 = vunpack.c.h.b16 %v1937
    %v2331 = vunpack.c.l.b16 %v1938
    %v2332 = vunpack.c.h.b16 %v1938
    %v2333 = vunpack.c.l.b16 %v1939
    %v2334 = vunpack.c.h.b16 %v1939
    %v2335 = vunpack.c.l.b16 %v1940
    %v2336 = vunpack.c.h.b16 %v1940
    %v2337 = vunpack.c.l.b16 %v1941
    %v2338 = vunpack.c.h.b16 %v1941
    %v2339 = vunpack.c.l.b16 %v1942
    %v2340 = vunpack.c.h.b16 %v1942
    %v2341 = vunpack.c.l.b16 %v1943
    %v2342 = vunpack.c.h.b16 %v1943
    %v2343 = vunpack.c.l.b16 %v1944
    %v2344 = vunpack.c.h.b16 %v1944
    %v2345 = vunpack.c.l.b16 %v1945
    %v2346 = vunpack.c.h.b16 %v1945
    %v2347 = vunpack.c.l.b16 %v1946
    %v2348 = vunpack.c.h.b16 %v1946
    %v2349 = vunpack.c.l.b16 %v1947
    %v2350 = vunpack.c.h.b16 %v1947
    %v2351 = vunpack.c.l.b16 %v1948
    %v2352 = vunpack.c.h.b16 %v1948
    %v2353 = vunpack.c.l.b16 %v1949
    %v2354 = vunpack.c.h.b16 %v1949
    %v2355 = vunpack.c.l.b16 %v1950
    %v2356 = vunpack.c.h.b16 %v1950
    %v2357 = vpack.c.b16 %v2105, %v2101
    %v2358 = vpack.c.b16 %v2106, %v2102
    %v2359 = vpack.c.b16 %v2107, %v2103
    %v2360 = vpack.c.b16 %v2108, %v2104
    %v2361 = vpack.c.b16 %v2113, %v2109
    %v2362 = vpack.c.b16 %v2114, %v2110
    %v2363 = vpack.c.b16 %v2115, %v2111
    %v2364 = vpack.c.b16 %v2116, %v2112
    %v2365 = vpack.c.b16 %v2121, %v2117
    %v2366 = vpack.c.b16 %v2122, %v2118
    %v2367 = vpack.c.b16 %v2123, %v2119
    %v2368 = vpack.c.b16 %v2124, %v2120
    %v2369 = vpack.c.b16 %v2129, %v2125
    %v2370 = vpack.c.b16 %v2130, %v2126
    %v2371 = vpack.c.b16 %v2131, %v2127
    %v2372 = vpack.c.b16 %v2132, %v2128
    %v2373 = vpack.c.b16 %v2137, %v2133
    %v2374 = vpack.c.b16 %v2138, %v2134
    %v2375 = vpack.c.b16 %v2139, %v2135
    %v2376 = vpack.c.b16 %v2140, %v2136
    %v2377 = vpack.c.b16 %v2145, %v2141
    %v2378 = vpack.c.b16 %v2146, %v2142
    %v2379 = vpack.c.b16 %v2147, %v2143
    %v2380 = vpack.c.b16 %v2148, %v2144
    %v2381 = vpack.c.b16 %v2153, %v2149
    %v2382 = vpack.c.b16 %v2154, %v2150
    %v2383 = vpack.c.b16 %v2155, %v2151
    %v2384 = vpack.c.b16 %v2156, %v2152
    %v2385 = vpack.c.b16 %v2161, %v2157
    %v2386 = vpack.c.b16 %v2162, %v2158
    %v2387 = vpack.c.b16 %v2163, %v2159
    %v2388 = vpack.c.b16 %v2164, %v2160
    %v2389 = vpack.c.b16 %v2169, %v2165
    %v2390 = vpack.c.b16 %v2170, %v2166
    %v2391 = vpack.c.b16 %v2171, %v2167
    %v2392 = vpack.c.b16 %v2172, %v2168
    %v2393 = vpack.c.b16 %v2177, %v2173
    %v2394 = vpack.c.b16 %v2178, %v2174
    %v2395 = vpack.c.b16 %v2179, %v2175
    %v2396 = vpack.c.b16 %v2180, %v2176
    %v2397 = vpack.c.b16 %v2185, %v2181
    %v2398 = vpack.c.b16 %v2186, %v2182
    %v2399 = vpack.c.b16 %v2187, %v2183
    %v2400 = vpack.c.b16 %v2188, %v2184
    %v2401 = vpack.c.b16 %v2193, %v2189
    %v2402 = vpack.c.b16 %v2194, %v2190
    %v2403 = vpack.c.b16 %v2195, %v2191
    %v2404 = vpack.c.b16 %v2196, %v2192
    %v2405 = vpack.c.b16 %v2201, %v2197
    %v2406 = vpack.c.b16 %v2202, %v2198
    %v2407 = vpack.c.b16 %v2203, %v2199
    %v2408 = vpack.c.b16 %v2204, %v2200
    %v2409 = vpack.c.b16 %v2209, %v2205
    %v2410 = vpack.c.b16 %v2210, %v2206
    %v2411 = vpack.c.b16 %v2211, %v2207
    %v2412 = vpack.c.b16 %v2212, %v2208
    %v2413 = vpack.c.b16 %v2217, %v2213
    %v2414 = vpack.c.b16 %v2218, %v2214
    %v2415 = vpack.c.b16 %v2219, %v2215
    %v2416 = vpack.c.b16 %v2220, %v2216
    %v2417 = vpack.c.b16 %v2225, %v2221
    %v2418 = vpack.c.b16 %v2226, %v2222
    %v2419 = vpack.c.b16 %v2227, %v2223
    %v2420 = vpack.c.b16 %v2228, %v2224
    %v2421 = vpack.c.b16 %v2233, %v2229
    %v2422 = vpack.c.b16 %v2234, %v2230
    %v2423 = vpack.c.b16 %v2235, %v2231
    %v2424 = vpack.c.b16 %v2236, %v2232
    %v2425 = vpack.c.b16 %v2241, %v2237
    %v2426 = vpack.c.b16 %v2242, %v2238
    %v2427 = vpack.c.b16 %v2243, %v2239
    %v2428 = vpack.c.b16 %v2244, %v2240
    %v2429 = vpack.c.b16 %v2249, %v2245
    %v2430 = vpack.c.b16 %v2250, %v2246
    %v2431 = vpack.c.b16 %v2251, %v2247
    %v2432 = vpack.c.b16 %v2252, %v2248
    %v2433 = vpack.c.b16 %v2257, %v2253
    %v2434 = vpack.c.b16 %v2258, %v2254
    %v2435 = vpack.c.b16 %v2259, %v2255
    %v2436 = vpack.c.b16 %v2260, %v2256
    %v2437 = vpack.c.b16 %v2265, %v2261
    %v2438 = vpack.c.b16 %v2266, %v2262
    %v2439 = vpack.c.b16 %v2267, %v2263
    %v2440 = vpack.c.b16 %v2268, %v2264
    %v2441 = vpack.c.b16 %v2273, %v2269
    %v2442 = vpack.c.b16 %v2274, %v2270
    %v2443 = vpack.c.b16 %v2275, %v2271
    %v2444 = vpack.c.b16 %v2276, %v2272
    %v2445 = vpack.c.b16 %v2281, %v2277
    %v2446 = vpack.c.b16 %v2282, %v2278
    %v2447 = vpack.c.b16 %v2283, %v2279
    %v2448 = vpack.c.b16 %v2284, %v2280
    %v2449 = vpack.c.b16 %v2289, %v2285
    %v2450 = vpack.c.b16 %v2290, %v2286
    %v2451 = vpack.c.b16 %v2291, %v2287
    %v2452 = vpack.c.b16 %v2292, %v2288
    %v2453 = vpack.c.b16 %v2297, %v2293
    %v2454 = vpack.c.b16 %v2298, %v2294
    %v2455 = vpack.c.b16 %v2299, %v2295
    %v2456 = vpack.c.b16 %v2300, %v2296
    %v2457 = vpack.c.b16 %v2305, %v2301
    %v2458 = vpack.c.b16 %v2306, %v2302
    %v2459 = vpack.c.b16 %v2307, %v2303
    %v2460 = vpack.c.b16 %v2308, %v2304
    %v2461 = vpack.c.b16 %v2313, %v2309
    %v2462 = vpack.c.b16 %v2314, %v2310
    %v2463 = vpack.c.b16 %v2315, %v2311
    %v2464 = vpack.c.b16 %v2316, %v2312
    %v2465 = vpack.c.b16 %v2321, %v2317
    %v2466 = vpack.c.b16 %v2322, %v2318
    %v2467 = vpack.c.b16 %v2323, %v2319
    %v2468 = vpack.c.b16 %v2324, %v2320
    %v2469 = vpack.c.b16 %v2329, %v2325
    %v2470 = vpack.c.b16 %v2330, %v2326
    %v2471 = vpack.c.b16 %v2331, %v2327
    %v2472 = vpack.c.b16 %v2332, %v2328
    %v2473 = vpack.c.b16 %v2337, %v2333
    %v2474 = vpack.c.b16 %v2338, %v2334
    %v2475 = vpack.c.b16 %v2339, %v2335
    %v2476 = vpack.c.b16 %v2340, %v2336
    %v2477 = vpack.c.b16 %v2345, %v2341
    %v2478 = vpack.c.b16 %v2346, %v2342
    %v2479 = vpack.c.b16 %v2347, %v2343
    %v2480 = vpack.c.b16 %v2348, %v2344
    %v2481 = vpack.c.b16 %v2353, %v2349
    %v2482 = vpack.c.b16 %v2354, %v2350
    %v2483 = vpack.c.b16 %v2355, %v2351
    %v2484 = vpack.c.b16 %v2356, %v2352
    %2613 = vmatprep.subr.bf16.mxu0 %v2386
    %2614 = vmatpush1.bf16.msra.mxu0 %v2385
    %2615 = vmatprep.subr.bf16.mxu0 %v2382
    %2616 = vmatpush1.bf16.msra.mxu0 %v2381
    %2617 = vmatprep.subr.bf16.mxu0 %v2378
    %2618 = vmatpush1.bf16.msra.mxu0 %v2377
    %2619 = vmatprep.subr.bf16.mxu0 %v2374
    %2620 = vmatpush1.bf16.msra.mxu0 %v2373
    %2621 = vmatprep.subr.bf16.mxu0 %v2370
    %2622 = vmatpush1.bf16.msra.mxu0 %v2369
    %2623 = vmatprep.subr.bf16.mxu0 %v2366
    %2624 = vmatpush1.bf16.msra.mxu0 %v2365
    %2625 = vmatprep.subr.bf16.mxu0 %v2362
    %2626 = vmatpush1.bf16.msra.mxu0 %v2361
    %2627 = vmatprep.subr.bf16.mxu0 %v2358
    %2628 = vmatpush1.bf16.msra.mxu0 %v2357
    %2629 = vmatprep.subr.bf16.mxu0 %v2418
    %2630 = vmatpush2.bf16.msra.mxu0 %v2417
    %2631 = vmatprep.subr.bf16.mxu0 %v2414
    %2632 = vmatpush2.bf16.msra.mxu0 %v2413
    %2633 = vmatprep.subr.bf16.mxu0 %v2410
    %2634 = vmatpush2.bf16.msra.mxu0 %v2409
    %2635 = vmatprep.subr.bf16.mxu0 %v2406
    %2636 = vmatpush2.bf16.msra.mxu0 %v2405
    %2637 = vmatprep.subr.bf16.mxu0 %v2402
    %2638 = vmatpush2.bf16.msra.mxu0 %v2401
    %2639 = vmatprep.subr.bf16.mxu0 %v2398
    %2640 = vmatpush2.bf16.msra.mxu0 %v2397
    %2641 = vmatprep.subr.bf16.mxu0 %v2394
    %2642 = vmatpush2.bf16.msra.mxu0 %v2393
    %2643 = vmatprep.subr.bf16.mxu0 %v2390
    %2644 = vmatpush2.bf16.msra.mxu0 %v2389
    %2645 = vmatprep.mubr.bf16.mxu0 %v1820
    %2646 = vmatmul.mubr.bf16.gmra.mxu0 %v1819
    %v2647 = vpop.f32.mrf.mxu0
    %v2648 = vadd.f32 %v1956, %v2647
    %v2649 = vpop.f32.mrf.mxu0
    %v2650 = vadd.f32 %v1960, %v2649
    %v2651 = vpop.f32.mrf.mxu0
    %v2652 = vpop.f32.mrf.mxu0
    %2653 = vdwg.mxu0
    %2654 = vmatprep.subr.bf16.mxu0 %v2450
    %2655 = vmatpush1.bf16.msra.mxu0 %v2449
    %2656 = vmatprep.subr.bf16.mxu0 %v2446
    %2657 = vmatpush1.bf16.msra.mxu0 %v2445
    %2658 = vmatprep.subr.bf16.mxu0 %v2442
    %2659 = vmatpush1.bf16.msra.mxu0 %v2441
    %2660 = vmatprep.subr.bf16.mxu0 %v2438
    %2661 = vmatpush1.bf16.msra.mxu0 %v2437
    %2662 = vmatprep.subr.bf16.mxu0 %v2434
    %2663 = vmatpush1.bf16.msra.mxu0 %v2433
    %2664 = vmatprep.subr.bf16.mxu0 %v2430
    %2665 = vmatpush1.bf16.msra.mxu0 %v2429
    %2666 = vmatprep.subr.bf16.mxu0 %v2426
    %2667 = vmatpush1.bf16.msra.mxu0 %v2425
    %2668 = vmatprep.subr.bf16.mxu0 %v2422
    %2669 = vmatpush1.bf16.msra.mxu0 %v2421
    %2670 = vmatprep.subr.bf16.mxu0 %v2482
    %2671 = vmatpush2.bf16.msra.mxu0 %v2481
    %2672 = vmatprep.subr.bf16.mxu0 %v2478
    %2673 = vmatpush2.bf16.msra.mxu0 %v2477
    %2674 = vmatprep.subr.bf16.mxu0 %v2474
    %2675 = vmatpush2.bf16.msra.mxu0 %v2473
    %2676 = vmatprep.subr.bf16.mxu0 %v2470
    %2677 = vmatpush2.bf16.msra.mxu0 %v2469
    %2678 = vmatprep.subr.bf16.mxu0 %v2466
    %2679 = vmatpush2.bf16.msra.mxu0 %v2465
    %2680 = vmatprep.subr.bf16.mxu0 %v2462
    %2681 = vmatpush2.bf16.msra.mxu0 %v2461
    %2682 = vmatprep.subr.bf16.mxu0 %v2458
    %2683 = vmatpush2.bf16.msra.mxu0 %v2457
    %2684 = vmatprep.subr.bf16.mxu0 %v2454
    %2685 = vmatpush2.bf16.msra.mxu0 %v2453
    %2686 = vmatprep.mubr.bf16.mxu0 %v1822
    %2687 = vmatmul.mubr.bf16.gmra.mxu0 %v1821
    %v2688 = vpop.f32.mrf.mxu0
    %v2689 = vadd.f32 %v2648, %v2688
    %v2690 = vpop.f32.mrf.mxu0
    %v2691 = vadd.f32 %v2650, %v2690
    %v2692 = vpop.f32.mrf.mxu0
    %v2693 = vpop.f32.mrf.mxu0
    %2694 = vdwg.mxu0
    %2695 = vmatprep.subr.bf16.mxu0 %v2388
    %2696 = vmatpush1.bf16.msra.mxu0 %v2387
    %2697 = vmatprep.subr.bf16.mxu0 %v2384
    %2698 = vmatpush1.bf16.msra.mxu0 %v2383
    %2699 = vmatprep.subr.bf16.mxu0 %v2380
    %2700 = vmatpush1.bf16.msra.mxu0 %v2379
    %2701 = vmatprep.subr.bf16.mxu0 %v2376
    %2702 = vmatpush1.bf16.msra.mxu0 %v2375
    %2703 = vmatprep.subr.bf16.mxu0 %v2372
    %2704 = vmatpush1.bf16.msra.mxu0 %v2371
    %2705 = vmatprep.subr.bf16.mxu0 %v2368
    %2706 = vmatpush1.bf16.msra.mxu0 %v2367
    %2707 = vmatprep.subr.bf16.mxu0 %v2364
    %2708 = vmatpush1.bf16.msra.mxu0 %v2363
    %2709 = vmatprep.subr.bf16.mxu0 %v2360
    %2710 = vmatpush1.bf16.msra.mxu0 %v2359
    %2711 = vmatprep.subr.bf16.mxu0 %v2420
    %2712 = vmatpush2.bf16.msra.mxu0 %v2419
    %2713 = vmatprep.subr.bf16.mxu0 %v2416
    %2714 = vmatpush2.bf16.msra.mxu0 %v2415
    %2715 = vmatprep.subr.bf16.mxu0 %v2412
    %2716 = vmatpush2.bf16.msra.mxu0 %v2411
    %2717 = vmatprep.subr.bf16.mxu0 %v2408
    %2718 = vmatpush2.bf16.msra.mxu0 %v2407
    %2719 = vmatprep.subr.bf16.mxu0 %v2404
    %2720 = vmatpush2.bf16.msra.mxu0 %v2403
    %2721 = vmatprep.subr.bf16.mxu0 %v2400
    %2722 = vmatpush2.bf16.msra.mxu0 %v2399
    %2723 = vmatprep.subr.bf16.mxu0 %v2396
    %2724 = vmatpush2.bf16.msra.mxu0 %v2395
    %2725 = vmatprep.subr.bf16.mxu0 %v2392
    %2726 = vmatpush2.bf16.msra.mxu0 %v2391
    %2727 = vmatprep.mubr.bf16.mxu0 %v1820
    %2728 = vmatmul.mubr.bf16.gmra.mxu0 %v1819
    %v2729 = vpop.f32.mrf.mxu0
    %v2730 = vadd.f32 %v1964, %v2729
    %v2731 = vpop.f32.mrf.mxu0
    %v2732 = vadd.f32 %v1968, %v2731
    %v2733 = vpop.f32.mrf.mxu0
    %v2734 = vpop.f32.mrf.mxu0
    %2735 = vdwg.mxu0
    %2736 = vmatprep.subr.bf16.mxu0 %v2452
    %2737 = vmatpush1.bf16.msra.mxu0 %v2451
    %2738 = vmatprep.subr.bf16.mxu0 %v2448
    %2739 = vmatpush1.bf16.msra.mxu0 %v2447
    %2740 = vmatprep.subr.bf16.mxu0 %v2444
    %2741 = vmatpush1.bf16.msra.mxu0 %v2443
    %2742 = vmatprep.subr.bf16.mxu0 %v2440
    %2743 = vmatpush1.bf16.msra.mxu0 %v2439
    %2744 = vmatprep.subr.bf16.mxu0 %v2436
    %2745 = vmatpush1.bf16.msra.mxu0 %v2435
    %2746 = vmatprep.subr.bf16.mxu0 %v2432
    %2747 = vmatpush1.bf16.msra.mxu0 %v2431
    %2748 = vmatprep.subr.bf16.mxu0 %v2428
    %2749 = vmatpush1.bf16.msra.mxu0 %v2427
    %2750 = vmatprep.subr.bf16.mxu0 %v2424
    %2751 = vmatpush1.bf16.msra.mxu0 %v2423
    %2752 = vmatprep.subr.bf16.mxu0 %v2484
    %2753 = vmatpush2.bf16.msra.mxu0 %v2483
    %2754 = vmatprep.subr.bf16.mxu0 %v2480
    %2755 = vmatpush2.bf16.msra.mxu0 %v2479
    %2756 = vmatprep.subr.bf16.mxu0 %v2476
    %2757 = vmatpush2.bf16.msra.mxu0 %v2475
    %2758 = vmatprep.subr.bf16.mxu0 %v2472
    %2759 = vmatpush2.bf16.msra.mxu0 %v2471
    %2760 = vmatprep.subr.bf16.mxu0 %v2468
    %2761 = vmatpush2.bf16.msra.mxu0 %v2467
    %2762 = vmatprep.subr.bf16.mxu0 %v2464
    %2763 = vmatpush2.bf16.msra.mxu0 %v2463
    %2764 = vmatprep.subr.bf16.mxu0 %v2460
    %2765 = vmatpush2.bf16.msra.mxu0 %v2459
    %2766 = vmatprep.subr.bf16.mxu0 %v2456
    %2767 = vmatpush2.bf16.msra.mxu0 %v2455
    %2768 = vmatprep.mubr.bf16.mxu0 %v1822
    %2769 = vmatmul.mubr.bf16.gmra.mxu0 %v1821
    %v2770 = vpop.f32.mrf.mxu0
    %v2771 = vadd.f32 %v2730, %v2770
    %v2772 = vpop.f32.mrf.mxu0
    %v2773 = vadd.f32 %v2732, %v2772
    %v2774 = vpop.f32.mrf.mxu0
    %v2775 = vpop.f32.mrf.mxu0
    %2776 = vdwg.mxu0
    %v2777 = vmax.f32 %v2689, 0.0
    %v2778 = vmax.f32 %v2691, 0.0
    %v2779 = vmax.f32 %v2771, 0.0
    %v2780 = vmax.f32 %v2773, 0.0
    %v2781 = vpack.c.bf16 %v2777, %v2777
    %v2782 = vpack.c.bf16 %v2778, %v2778
    %v2783 = vpack.c.bf16 %v2779, %v2779
    %v2784 = vpack.c.bf16 %v2780, %v2780
    %v2785 = vld [vmem:[#allocation10] sm:$0xf]
    %v2786 = vld [vmem:[#allocation10 + $0x4] sm:$0xf]
    %v2787 = vld [vmem:[#allocation10 + $0x8] sm:$0xf]
    %v2788 = vld [vmem:[#allocation10 + $0xc] sm:$0xf]
    %v2789 = vld [vmem:[#allocation10 + $0x10] sm:$0xf]
    %v2790 = vld [vmem:[#allocation10 + $0x14] sm:$0xf]
    %v2791 = vld [vmem:[#allocation10 + $0x18] sm:$0xf]
    %v2792 = vld [vmem:[#allocation10 + $0x1c] sm:$0xf]
    %v2793 = vld [vmem:[#allocation10 + $0x20] sm:$0xf]
    %v2794 = vld [vmem:[#allocation10 + $0x24] sm:$0xf]
    %v2795 = vld [vmem:[#allocation10 + $0x28] sm:$0xf]
    %v2796 = vld [vmem:[#allocation10 + $0x2c] sm:$0xf]
    %v2797 = vld [vmem:[#allocation10 + $0x30] sm:$0xf]
    %v2798 = vld [vmem:[#allocation10 + $0x34] sm:$0xf]
    %v2799 = vld [vmem:[#allocation10 + $0x38] sm:$0xf]
    %v2800 = vld [vmem:[#allocation10 + $0x3c] sm:$0xf]
    %v2801 = vld [vmem:[#allocation10 + $0x40] sm:$0xf]
    %v2802 = vld [vmem:[#allocation10 + $0x44] sm:$0xf]
    %v2803 = vld [vmem:[#allocation10 + $0x48] sm:$0xf]
    %v2804 = vld [vmem:[#allocation10 + $0x4c] sm:$0xf]
    %v2805 = vld [vmem:[#allocation10 + $0x50] sm:$0xf]
    %v2806 = vld [vmem:[#allocation10 + $0x54] sm:$0xf]
    %v2807 = vld [vmem:[#allocation10 + $0x58] sm:$0xf]
    %v2808 = vld [vmem:[#allocation10 + $0x5c] sm:$0xf]
    %v2809 = vld [vmem:[#allocation10 + $0x60] sm:$0xf]
    %v2810 = vld [vmem:[#allocation10 + $0x64] sm:$0xf]
    %v2811 = vld [vmem:[#allocation10 + $0x68] sm:$0xf]
    %v2812 = vld [vmem:[#allocation10 + $0x6c] sm:$0xf]
    %v2813 = vld [vmem:[#allocation10 + $0x70] sm:$0xf]
    %v2814 = vld [vmem:[#allocation10 + $0x74] sm:$0xf]
    %v2815 = vld [vmem:[#allocation10 + $0x78] sm:$0xf]
    %v2816 = vld [vmem:[#allocation10 + $0x7c] sm:$0xf]
    %v2817 = vld [vmem:[#allocation10 + $0x80] sm:$0xf]
    %v2818 = vld [vmem:[#allocation10 + $0x84] sm:$0xf]
    %v2819 = vld [vmem:[#allocation10 + $0x88] sm:$0xf]
    %v2820 = vld [vmem:[#allocation10 + $0x8c] sm:$0xf]
    %v2821 = vld [vmem:[#allocation10 + $0x90] sm:$0xf]
    %v2822 = vld [vmem:[#allocation10 + $0x94] sm:$0xf]
    %v2823 = vld [vmem:[#allocation10 + $0x98] sm:$0xf]
    %v2824 = vld [vmem:[#allocation10 + $0x9c] sm:$0xf]
    %v2825 = vld [vmem:[#allocation10 + $0xa0] sm:$0xf]
    %v2826 = vld [vmem:[#allocation10 + $0xa4] sm:$0xf]
    %v2827 = vld [vmem:[#allocation10 + $0xa8] sm:$0xf]
    %v2828 = vld [vmem:[#allocation10 + $0xac] sm:$0xf]
    %v2829 = vld [vmem:[#allocation10 + $0xb0] sm:$0xf]
    %v2830 = vld [vmem:[#allocation10 + $0xb4] sm:$0xf]
    %v2831 = vld [vmem:[#allocation10 + $0xb8] sm:$0xf]
    %v2832 = vld [vmem:[#allocation10 + $0xbc] sm:$0xf]
    %v2833 = vld [vmem:[#allocation10 + $0xc0] sm:$0xf]
    %v2834 = vld [vmem:[#allocation10 + $0xc4] sm:$0xf]
    %v2835 = vld [vmem:[#allocation10 + $0xc8] sm:$0xf]
    %v2836 = vld [vmem:[#allocation10 + $0xcc] sm:$0xf]
    %v2837 = vld [vmem:[#allocation10 + $0xd0] sm:$0xf]
    %v2838 = vld [vmem:[#allocation10 + $0xd4] sm:$0xf]
    %v2839 = vld [vmem:[#allocation10 + $0xd8] sm:$0xf]
    %v2840 = vld [vmem:[#allocation10 + $0xdc] sm:$0xf]
    %v2841 = vld [vmem:[#allocation10 + $0xe0] sm:$0xf]
    %v2842 = vld [vmem:[#allocation10 + $0xe4] sm:$0xf]
    %v2843 = vld [vmem:[#allocation10 + $0xe8] sm:$0xf]
    %v2844 = vld [vmem:[#allocation10 + $0xec] sm:$0xf]
    %v2845 = vld [vmem:[#allocation10 + $0xf0] sm:$0xf]
    %v2846 = vld [vmem:[#allocation10 + $0xf4] sm:$0xf]
    %v2847 = vld [vmem:[#allocation10 + $0xf8] sm:$0xf]
    %v2848 = vld [vmem:[#allocation10 + $0xfc] sm:$0xf]
    %v2849 = vld [vmem:[%s6] sm:$0x1]
    %v2851 = vlaneseq
    %v2852 = vshrl.u32 %v2851, 7
    %v2853 = vsub.s32 0, %v2852
    %v2854 = vrot.slane %v2849, %v2853
    %v2920 = vunpack.c.l.b16 %v2785
    %v2921 = vunpack.c.l.b16 %v2786
    %v2922 = vunpack.c.l.b16 %v2787
    %v2923 = vunpack.c.l.b16 %v2788
    %v2924 = vunpack.c.l.b16 %v2789
    %v2925 = vunpack.c.l.b16 %v2790
    %v2926 = vunpack.c.l.b16 %v2791
    %v2927 = vunpack.c.l.b16 %v2792
    %v2928 = vunpack.c.l.b16 %v2793
    %v2929 = vunpack.c.l.b16 %v2794
    %v2930 = vunpack.c.l.b16 %v2795
    %v2931 = vunpack.c.l.b16 %v2796
    %v2932 = vunpack.c.l.b16 %v2797
    %v2933 = vunpack.c.l.b16 %v2798
    %v2934 = vunpack.c.l.b16 %v2799
    %v2935 = vunpack.c.l.b16 %v2800
    %v2936 = vunpack.c.l.b16 %v2801
    %v2937 = vunpack.c.l.b16 %v2802
    %v2938 = vunpack.c.l.b16 %v2803
    %v2939 = vunpack.c.l.b16 %v2804
    %v2940 = vunpack.c.l.b16 %v2805
    %v2941 = vunpack.c.l.b16 %v2806
    %v2942 = vunpack.c.l.b16 %v2807
    %v2943 = vunpack.c.l.b16 %v2808
    %v2944 = vunpack.c.l.b16 %v2809
    %v2945 = vunpack.c.l.b16 %v2810
    %v2946 = vunpack.c.l.b16 %v2811
    %v2947 = vunpack.c.l.b16 %v2812
    %v2948 = vunpack.c.l.b16 %v2813
    %v2949 = vunpack.c.l.b16 %v2814
    %v2950 = vunpack.c.l.b16 %v2815
    %v2951 = vunpack.c.l.b16 %v2816
    %v2952 = vunpack.c.l.b16 %v2817
    %v2953 = vunpack.c.l.b16 %v2818
    %v2954 = vunpack.c.l.b16 %v2819
    %v2955 = vunpack.c.l.b16 %v2820
    %v2956 = vunpack.c.l.b16 %v2821
    %v2957 = vunpack.c.l.b16 %v2822
    %v2958 = vunpack.c.l.b16 %v2823
    %v2959 = vunpack.c.l.b16 %v2824
    %v2960 = vunpack.c.l.b16 %v2825
    %v2961 = vunpack.c.l.b16 %v2826
    %v2962 = vunpack.c.l.b16 %v2827
    %v2963 = vunpack.c.l.b16 %v2828
    %v2964 = vunpack.c.l.b16 %v2829
    %v2965 = vunpack.c.l.b16 %v2830
    %v2966 = vunpack.c.l.b16 %v2831
    %v2967 = vunpack.c.l.b16 %v2832
    %v2968 = vunpack.c.l.b16 %v2833
    %v2969 = vunpack.c.l.b16 %v2834
    %v2970 = vunpack.c.l.b16 %v2835
    %v2971 = vunpack.c.l.b16 %v2836
    %v2972 = vunpack.c.l.b16 %v2837
    %v2973 = vunpack.c.l.b16 %v2838
    %v2974 = vunpack.c.l.b16 %v2839
    %v2975 = vunpack.c.l.b16 %v2840
    %v2976 = vunpack.c.l.b16 %v2841
    %v2977 = vunpack.c.l.b16 %v2842
    %v2978 = vunpack.c.l.b16 %v2843
    %v2979 = vunpack.c.l.b16 %v2844
    %v2980 = vunpack.c.l.b16 %v2845
    %v2981 = vunpack.c.l.b16 %v2846
    %v2982 = vunpack.c.l.b16 %v2847
    %v2983 = vunpack.c.l.b16 %v2848
    %v2984 = vpack.c.b16 %v2921, %v2920
    %v2985 = vpack.c.b16 %v2923, %v2922
    %v2986 = vpack.c.b16 %v2925, %v2924
    %v2987 = vpack.c.b16 %v2927, %v2926
    %v2988 = vpack.c.b16 %v2929, %v2928
    %v2989 = vpack.c.b16 %v2931, %v2930
    %v2990 = vpack.c.b16 %v2933, %v2932
    %v2991 = vpack.c.b16 %v2935, %v2934
    %v2992 = vpack.c.b16 %v2937, %v2936
    %v2993 = vpack.c.b16 %v2939, %v2938
    %v2994 = vpack.c.b16 %v2941, %v2940
    %v2995 = vpack.c.b16 %v2943, %v2942
    %v2996 = vpack.c.b16 %v2945, %v2944
    %v2997 = vpack.c.b16 %v2947, %v2946
    %v2998 = vpack.c.b16 %v2949, %v2948
    %v2999 = vpack.c.b16 %v2951, %v2950
    %v3000 = vpack.c.b16 %v2953, %v2952
    %v3001 = vpack.c.b16 %v2955, %v2954
    %v3002 = vpack.c.b16 %v2957, %v2956
    %v3003 = vpack.c.b16 %v2959, %v2958
    %v3004 = vpack.c.b16 %v2961, %v2960
    %v3005 = vpack.c.b16 %v2963, %v2962
    %v3006 = vpack.c.b16 %v2965, %v2964
    %v3007 = vpack.c.b16 %v2967, %v2966
    %v3008 = vpack.c.b16 %v2969, %v2968
    %v3009 = vpack.c.b16 %v2971, %v2970
    %v3010 = vpack.c.b16 %v2973, %v2972
    %v3011 = vpack.c.b16 %v2975, %v2974
    %v3012 = vpack.c.b16 %v2977, %v2976
    %v3013 = vpack.c.b16 %v2979, %v2978
    %v3014 = vpack.c.b16 %v2981, %v2980
    %v3015 = vpack.c.b16 %v2983, %v2982
    %3048 = vmatprep.subr.bf16.mxu0 0
    %3049 = vmatpush1.bf16.msra.mxu0 %v2991
    %3050 = vmatprep.subr.bf16.mxu0 0
    %3051 = vmatpush1.bf16.msra.mxu0 %v2990
    %3052 = vmatprep.subr.bf16.mxu0 0
    %3053 = vmatpush1.bf16.msra.mxu0 %v2989
    %3054 = vmatprep.subr.bf16.mxu0 0
    %3055 = vmatpush1.bf16.msra.mxu0 %v2988
    %3056 = vmatprep.subr.bf16.mxu0 0
    %3057 = vmatpush1.bf16.msra.mxu0 %v2987
    %3058 = vmatprep.subr.bf16.mxu0 0
    %3059 = vmatpush1.bf16.msra.mxu0 %v2986
    %3060 = vmatprep.subr.bf16.mxu0 0
    %3061 = vmatpush1.bf16.msra.mxu0 %v2985
    %3062 = vmatprep.subr.bf16.mxu0 0
    %3063 = vmatpush1.bf16.msra.mxu0 %v2984
    %3064 = vmatprep.subr.bf16.mxu0 0
    %3065 = vmatpush2.bf16.msra.mxu0 %v2999
    %3066 = vmatprep.subr.bf16.mxu0 0
    %3067 = vmatpush2.bf16.msra.mxu0 %v2998
    %3068 = vmatprep.subr.bf16.mxu0 0
    %3069 = vmatpush2.bf16.msra.mxu0 %v2997
    %3070 = vmatprep.subr.bf16.mxu0 0
    %3071 = vmatpush2.bf16.msra.mxu0 %v2996
    %3072 = vmatprep.subr.bf16.mxu0 0
    %3073 = vmatpush2.bf16.msra.mxu0 %v2995
    %3074 = vmatprep.subr.bf16.mxu0 0
    %3075 = vmatpush2.bf16.msra.mxu0 %v2994
    %3076 = vmatprep.subr.bf16.mxu0 0
    %3077 = vmatpush2.bf16.msra.mxu0 %v2993
    %3078 = vmatprep.subr.bf16.mxu0 0
    %3079 = vmatpush2.bf16.msra.mxu0 %v2992
    %3080 = vmatprep.mubr.bf16.mxu0 %v2782
    %3081 = vmatmul.mubr.bf16.gmra.mxu0 %v2781
    %v3082 = vpop.f32.mrf.mxu0
    %v3083 = vadd.f32 %v2854, %v3082
    %v3084 = vpop.f32.mrf.mxu0
    %v3085 = vpop.f32.mrf.mxu0
    %v3086 = vpop.f32.mrf.mxu0
    %3087 = vdwg.mxu0
    %3088 = vmatprep.subr.bf16.mxu0 0
    %3089 = vmatpush1.bf16.msra.mxu0 %v3007
    %3090 = vmatprep.subr.bf16.mxu0 0
    %3091 = vmatpush1.bf16.msra.mxu0 %v3006
    %3092 = vmatprep.subr.bf16.mxu0 0
    %3093 = vmatpush1.bf16.msra.mxu0 %v3005
    %3094 = vmatprep.subr.bf16.mxu0 0
    %3095 = vmatpush1.bf16.msra.mxu0 %v3004
    %3096 = vmatprep.subr.bf16.mxu0 0
    %3097 = vmatpush1.bf16.msra.mxu0 %v3003
    %3098 = vmatprep.subr.bf16.mxu0 0
    %3099 = vmatpush1.bf16.msra.mxu0 %v3002
    %3100 = vmatprep.subr.bf16.mxu0 0
    %3101 = vmatpush1.bf16.msra.mxu0 %v3001
    %3102 = vmatprep.subr.bf16.mxu0 0
    %3103 = vmatpush1.bf16.msra.mxu0 %v3000
    %3104 = vmatprep.subr.bf16.mxu0 0
    %3105 = vmatpush2.bf16.msra.mxu0 %v3015
    %3106 = vmatprep.subr.bf16.mxu0 0
    %3107 = vmatpush2.bf16.msra.mxu0 %v3014
    %3108 = vmatprep.subr.bf16.mxu0 0
    %3109 = vmatpush2.bf16.msra.mxu0 %v3013
    %3110 = vmatprep.subr.bf16.mxu0 0
    %3111 = vmatpush2.bf16.msra.mxu0 %v3012
    %3112 = vmatprep.subr.bf16.mxu0 0
    %3113 = vmatpush2.bf16.msra.mxu0 %v3011
    %3114 = vmatprep.subr.bf16.mxu0 0
    %3115 = vmatpush2.bf16.msra.mxu0 %v3010
    %3116 = vmatprep.subr.bf16.mxu0 0
    %3117 = vmatpush2.bf16.msra.mxu0 %v3009
    %3118 = vmatprep.subr.bf16.mxu0 0
    %3119 = vmatpush2.bf16.msra.mxu0 %v3008
    %3120 = vmatprep.mubr.bf16.mxu0 %v2784
    %3121 = vmatmul.mubr.bf16.gmra.mxu0 %v2783
    %v3122 = vpop.f32.mrf.mxu0
    %v3123 = vadd.f32 %v3083, %v3122
    %v3124 = vpop.f32.mrf.mxu0
    %v3125 = vpop.f32.mrf.mxu0
    %v3126 = vpop.f32.mrf.mxu0
    %3127 = vdwg.mxu0
    %3128 = vst [vmem:[#allocation11] sm:$0xff] %v3123
    // Predicated region
    $region50: #{tpu_custom_call.1} parent=1 // pred_check
      _
    $region51: #{tpu_custom_call.1} parent=1 // pred_check_branch
      %3130 = sbr.rel (0) target = $region53
    $region52: #{tpu_custom_call.1} parent=1 // pred_region
      %s3132 = ssub.s32 128, 128
      %3133 = vsyncadd [#allocation4], %s3132
      %s3135 = sshll.u32 [#allocation11], 4
      %s3136 = int_to_ptr.vmem [resolvable:$true] %s3135
      %3138 = dma.vmem_to_hbm [thread:$0]  %s3136, 128, %s7, [#allocation4]
    $region53: #{tpu_custom_call.1} parent=1 // pred_fallthru
      _
    // Predicated region
    $region54: #{tpu_custom_call.1} parent=1 // pred_check
      _
    $region55: #{tpu_custom_call.1} parent=1 // pred_check_branch
      %3140 = sbr.rel (0) target = $region57
    $region56: #{tpu_custom_call.1} parent=1 // pred_region
      %3141 = dma.done [#allocation4], 128
    $region57: #{tpu_custom_call.1} parent=1 // pred_fallthru
      _
    %3142 = vsyncpa [#allocation3], 1
    %3143 = vsyncpa [#allocation6], 1
    %3144 = vsyncpa [#allocation9], 1
    %3145 = vsyncpa [#allocation4], 1

</llo_original>
